<compile_context>
chip_gen: v7x
topology: tpu7x:2x2x1
jax: 0.10.0
libtpu: 0.0.40
codegen_flags: <defaults>
</compile_context>

<pallas_src>
import functools
import math

import jax
import jax.numpy as jnp
import numpy as np
from jax import lax
from jax.experimental import pallas as pl
from jax.experimental.pallas import tpu as pltpu


def _rll_tile_kernel(xc_ref, xat_ref, sqc_ref, labc_ref, basea_ref, laba_ref,
                     pos_ref, wsum_ref, numer_ref, *, margin, t, tm, tn):
    """One (anchor block i, candidate block j) tile of the pairwise loss.

    xc_ref    : (TN, D) bf16 candidate embeddings, pre-scaled by 2
    xat_ref   : (D, TM) bf16 anchor embeddings, pre-transposed (K-major)
    sqc_ref   : (TN, 1) f32  ||x_c||^2            (pad rows = 1e30)
    labc_ref  : (TN, 1) i32  candidate labels     (pad rows = -1)
    basea_ref : (1, TM) f32  alpha - ||x_a||^2
    laba_ref  : (1, TM) i32  anchor labels
    outputs   : (8, TM) f32  per-anchor sublane-folded partials, accumulated
                across the candidate (j) grid axis.
    """
    i = pl.program_id(0)          # anchor block    (parallel)
    j = pl.program_id(1)          # candidate block (reduction / arbitrary)

    @pl.when(j == 0)
    def _init():
        pos_ref[...] = jnp.zeros_like(pos_ref)
        wsum_ref[...] = jnp.zeros_like(wsum_ref)
        numer_ref[...] = jnp.zeros_like(numer_ref)

    # MXU: g2[c, a] = 2 * <x_c, x_a> (bf16 inputs, f32 accumulation); anchor
    # operand already in (K, N) form -> no per-tile transpose.
    g2 = lax.dot_general(xc_ref[...], xat_ref[...], (((1,), (0,)), ((), ())),
                         preferred_element_type=jnp.float32)        # (TN, TM)

    # am = alpha - dist = 2<x_c,x_a> + (alpha - ||x_a||^2) - ||x_c||^2.
    am = (g2 + basea_ref[...]) - sqc_ref[...]                        # (TN, TM)

    same = labc_ref[...] == laba_ref[...]                            # (TN, TM)

    # Positive pairs: same label & dist > alpha - margin  <=>  am < margin.
    # (Pad candidates carry label -1, never "same" as a real anchor.)
    pos_contrib = jnp.where(same & (am < margin), margin - am, 0.0)

    # Negative pairs: different label & dist < alpha  <=>  am > 0.
    # (Pad candidates give am ~ -1e30 -> w == 0 and am * w == 0, no NaN.)
    w = jnp.where((~same) & (am > 0.0), jnp.exp(t * am), 0.0)

    def fold(x):
        # (TN, TM) -> (8, TM) using plain full-vreg adds over static
        # sublane-aligned slices (no XLU cross-sublane reduce).
        acc = x[0:8, :]
        for k in range(1, tn // 8):
            acc = acc + x[k * 8:(k + 1) * 8, :]
        return acc

    wsum_ref[...] += fold(w)
    numer_ref[...] += fold(am * w)

    # Exact self-pair exclusion only where the diagonal can appear.
    has_diag = (j * tn < (i + 1) * tm) & (i * tm < (j + 1) * tn)

    @pl.when(has_diag)
    def _diag():
        cand_gid = j * tn + lax.broadcasted_iota(jnp.int32, (tn, tm), 0)
        anch_gid = i * tm + lax.broadcasted_iota(jnp.int32, (tn, tm), 1)
        pos_ref[...] += fold(jnp.where(cand_gid == anch_gid, 0.0, pos_contrib))

    @pl.when(jnp.logical_not(has_diag))
    def _off_diag():
        pos_ref[...] += fold(pos_contrib)


@functools.partial(jax.jit,
                   static_argnames=("margin", "alpha", "t", "tm", "tn"))
def ranked_list_loss(embeddings, labels, *, margin, alpha, t=10.0,
                     tm=256, tn=256):
    """Returns (loss, N) — matching RankedListLoss.forward.

    tm / tn are the anchor / candidate tile sizes.  Defaults (256, 256) suit
    v6e / v7x; on v5e use tn=128 and keep tm >= 256 (raise Buffered depth on
    the candidate spec if candidate DMA is exposed there).
    """
    n, d = embeddings.shape
    blk = (tm * tn) // math.gcd(tm, tn)       # pad N to a multiple of both
    n_pad = pl.cdiv(n, blk) * blk
    pad = n_pad - n

    x32 = embeddings.astype(jnp.float32)
    sq = jnp.sum(x32 * x32, axis=1)           # f32 norms from the f32 input
    lab = labels.astype(jnp.int32)

    # Candidate operand pre-scaled by 2 (exact in bf16, fuses with the cast)
    # so the kernel's MXU product is already 2<x_c, x_a>.
    xc = (2.0 * x32).astype(jnp.bfloat16)
    xa = x32.astype(jnp.bfloat16)
    if pad:
        xc = jnp.pad(xc, ((0, pad), (0, 0)))
        xa = jnp.pad(xa, ((0, pad), (0, 0)))
        # Finite sentinel (NOT +inf): keeps am finite so am * w == 0, not NaN.
        sq = jnp.pad(sq, (0, pad), constant_values=1e30)
        lab = jnp.pad(lab, (0, pad), constant_values=-1)
    xat = xa.T                                 # (D, n_pad) anchor operand

    sq_col = sq.reshape(n_pad, 1)              # candidate ||x||^2
    lab_col = lab.reshape(n_pad, 1)            # candidate labels
    base_row = (alpha - sq).reshape(1, n_pad)  # alpha - anchor ||x||^2
    lab_row = lab.reshape(1, n_pad)            # anchor labels

    kernel = functools.partial(_rll_tile_kernel, margin=float(margin),
                               t=float(t), tm=tm, tn=tn)

    grid = (n_pad // tm, n_pad // tn)          # (anchor, candidate) blocks
    out_spec = pl.BlockSpec((8, tm), lambda i, j: (0, i))   # lane-dense

    pos_v, wsum_v, numer_v = pl.pallas_call(
        kernel,
        out_shape=(jax.ShapeDtypeStruct((8, n_pad), jnp.float32),) * 3,
        grid=grid,
        in_specs=[
            pl.BlockSpec((tn, d), lambda i, j: (j, 0)),   # candidate x (x2)
            pl.BlockSpec((d, tm), lambda i, j: (0, i)),   # anchor x^T
            pl.BlockSpec((tn, 1), lambda i, j: (j, 0)),   # candidate ||x||^2
            pl.BlockSpec((tn, 1), lambda i, j: (j, 0)),   # candidate labels
            pl.BlockSpec((1, tm), lambda i, j: (0, i)),   # alpha - ||x_a||^2
            pl.BlockSpec((1, tm), lambda i, j: (0, i)),   # anchor labels
        ],
        out_specs=(out_spec, out_spec, out_spec),
        compiler_params=pltpu.CompilerParams(
            dimension_semantics=("parallel", "arbitrary"),
            vmem_limit_bytes=32 * 1024 * 1024),
    )(xc, xat, sq_col, lab_col, base_row, lab_row)

    # O(N) epilogue: fold the 8 sublane partials, then per-class w-sum
    # normalisation via segment_sum (no NxN mask materialisation).
    pos = jnp.sum(pos_v, axis=0)[:n]
    wsum = jnp.sum(wsum_v, axis=0)[:n]
    numer = jnp.sum(numer_v, axis=0)[:n]

    lab_n = labels.astype(jnp.int32)
    _, inv = jnp.unique(lab_n, size=n, return_inverse=True)
    inv = inv.ravel()
    class_wsum = jax.ops.segment_sum(wsum, inv, num_segments=n)[inv]
    has_neg = class_wsum > 0.0
    neg_loss = jnp.sum(
        jnp.where(has_neg, numer / jnp.where(has_neg, class_wsum, 1.0), 0.0))
    loss = jnp.sum(pos) + neg_loss
    return loss, n


if __name__ == "__main__":
    key = jax.random.PRNGKey(0)
    k_emb, k_lab = jax.random.split(key)

    N, D = 8, 32
    # Small-norm embeddings so both the positive (> alpha - margin) and the
    # negative (< alpha) branches of the loss are exercised.
    embeddings = 0.1 * jax.random.normal(k_emb, (N, D), dtype=jnp.float32)
    labels = jax.random.randint(k_lab, (N,), 0, 3, dtype=jnp.int32)

    margin, alpha = 0.4, 1.2

    loss, count = ranked_list_loss(embeddings, labels, margin=margin, alpha=alpha)
    loss = jax.block_until_ready(loss)
    assert int(count) == N

    # Direct numpy transcription of the PyTorch reference as a check
    # (bf16 Gram in the kernel => loose tolerance).
    def reference(emb, lab, margin, alpha, t=10.0):
        x = np.asarray(emb, dtype=np.float64)
        lab = np.asarray(lab)
        sq = (x ** 2).sum(axis=1)
        dist = -2.0 * x @ x.T + sq[None, :] + sq[:, None]
        total = 0.0
        for c in np.unique(lab):
            pos_mask = lab == c
            neg_mask = ~pos_mask
            ap = dist[pos_mask][:, pos_mask]
            an = dist[pos_mask][:, neg_mask]
            ap = ap[(ap > alpha - margin) & ~np.eye(len(ap), dtype=bool)]
            an = an[an < alpha]
            w = np.exp(t * (alpha - an))
            if ap.size > 0:
                total += (ap - alpha + margin).sum()
            if an.size > 0:
                total += ((alpha - an) * (w / w.sum())).sum()
        return total

    ref = reference(embeddings, labels, margin, alpha)
    np.testing.assert_allclose(float(loss), ref, rtol=0.1, atol=1e-4)
    print("KERNEL_OK")
</pallas_src>

<mosaic_0001>
module attributes {stable_mosaic.version = 11 : i64} {
  func.func @_rll_tile_kernel(%arg0: i32, %arg1: i32, %arg2: memref<256x32xbf16, #tpu.memory_space<vmem>>, %arg3: memref<32x256xbf16, #tpu.memory_space<vmem>>, %arg4: memref<256x1xf32, #tpu.memory_space<vmem>>, %arg5: memref<256x1xi32, #tpu.memory_space<vmem>>, %arg6: memref<1x256xf32, #tpu.memory_space<vmem>>, %arg7: memref<1x256xi32, #tpu.memory_space<vmem>>, %arg8: memref<8x256xf32, #tpu.memory_space<vmem>>, %arg9: memref<8x256xf32, #tpu.memory_space<vmem>>, %arg10: memref<8x256xf32, #tpu.memory_space<vmem>>) attributes {dimension_semantics = [#tpu.dimension_semantics<parallel>, #tpu.dimension_semantics<arbitrary>], iteration_bounds = array<i64: 1, 1>, scalar_prefetch = 0 : i64, scratch_operands = 0 : i64, tpu.core_type = #tpu.core_type<tc>, window_params = [{transform_indices = @transform_0, window_bounds = array<i64: 256, 32>}, {transform_indices = @transform_1, window_bounds = array<i64: 32, 256>}, {transform_indices = @transform_2, window_bounds = array<i64: 256, 1>}, {transform_indices = @transform_3, window_bounds = array<i64: 256, 1>}, {transform_indices = @transform_4, window_bounds = array<i64: 1, 256>}, {transform_indices = @transform_5, window_bounds = array<i64: 1, 256>}, {transform_indices = @transform_6, window_bounds = array<i64: 8, 256>}, {transform_indices = @transform_7, window_bounds = array<i64: 8, 256>}, {transform_indices = @transform_8, window_bounds = array<i64: 8, 256>}]} {
    %c0_i32 = arith.constant 0 : i32
    %0 = arith.cmpi eq, %arg1, %c0_i32 : i32
    %1 = arith.extui %0 : i1 to i32
    %c0_i32_0 = arith.constant 0 : i32
    %2 = arith.cmpi ne, %1, %c0_i32_0 : i32
    scf.if %2 {
      %cst_33 = arith.constant 0.000000e+00 : f32
      %180 = vector.broadcast %cst_33 : f32 to vector<8x256xf32>
      %c0_34 = arith.constant 0 : index
      %c0_35 = arith.constant 0 : index
      %181 = vector.load %arg8[%c0_34, %c0_35] : memref<8x256xf32, #tpu.memory_space<vmem>>, vector<8x256xf32>
      tpu.vector_store %arg8[%c0_34, %c0_35], %180 {strides = array<i32>} : memref<8x256xf32, #tpu.memory_space<vmem>>, vector<8x256xf32>,
      %cst_36 = arith.constant 0.000000e+00 : f32
      %182 = vector.broadcast %cst_36 : f32 to vector<8x256xf32>
      %c0_37 = arith.constant 0 : index
      %c0_38 = arith.constant 0 : index
      %183 = vector.load %arg9[%c0_37, %c0_38] : memref<8x256xf32, #tpu.memory_space<vmem>>, vector<8x256xf32>
      tpu.vector_store %arg9[%c0_37, %c0_38], %182 {strides = array<i32>} : memref<8x256xf32, #tpu.memory_space<vmem>>, vector<8x256xf32>,
      %cst_39 = arith.constant 0.000000e+00 : f32
      %184 = vector.broadcast %cst_39 : f32 to vector<8x256xf32>
      %c0_40 = arith.constant 0 : index
      %c0_41 = arith.constant 0 : index
      %185 = vector.load %arg10[%c0_40, %c0_41] : memref<8x256xf32, #tpu.memory_space<vmem>>, vector<8x256xf32>
      tpu.vector_store %arg10[%c0_40, %c0_41], %184 {strides = array<i32>} : memref<8x256xf32, #tpu.memory_space<vmem>>, vector<8x256xf32>,
    } else {
    }
    %c0 = arith.constant 0 : index
    %c0_1 = arith.constant 0 : index
    %3 = vector.load %arg2[%c0, %c0_1] : memref<256x32xbf16, #tpu.memory_space<vmem>>, vector<256x32xbf16>
    %c0_2 = arith.constant 0 : index
    %c0_3 = arith.constant 0 : index
    %4 = vector.load %arg3[%c0_2, %c0_3] : memref<32x256xbf16, #tpu.memory_space<vmem>>, vector<32x256xbf16>
    %cst = arith.constant dense<0.000000e+00> : vector<256x256xf32>
    %5 = tpu.matmul %3, %4, %cst {dimension_numbers = #tpu.dot_dimension_numbers<[1], [0], [0], [1], [0, 0, 1, 1], [], []>} : vector<256x32xbf16>, vector<32x256xbf16>, vector<256x256xf32> -> vector<256x256xf32>
    %c0_4 = arith.constant 0 : index
    %c0_5 = arith.constant 0 : index
    %6 = vector.load %arg6[%c0_4, %c0_5] : memref<1x256xf32, #tpu.memory_space<vmem>>, vector<1x256xf32>
    %7 = vector.broadcast %6 : vector<1x256xf32> to vector<256x256xf32>
    %8 = arith.addf %5, %7 : vector<256x256xf32>
    %c0_6 = arith.constant 0 : index
    %c0_7 = arith.constant 0 : index
    %9 = vector.load %arg4[%c0_6, %c0_7] : memref<256x1xf32, #tpu.memory_space<vmem>>, vector<256x1xf32>
    %10 = vector.broadcast %9 : vector<256x1xf32> to vector<256x256xf32>
    %11 = arith.subf %8, %10 : vector<256x256xf32>
    %c0_8 = arith.constant 0 : index
    %c0_9 = arith.constant 0 : index
    %12 = vector.load %arg5[%c0_8, %c0_9] : memref<256x1xi32, #tpu.memory_space<vmem>>, vector<256x1xi32>
    %c0_10 = arith.constant 0 : index
    %c0_11 = arith.constant 0 : index
    %13 = vector.load %arg7[%c0_10, %c0_11] : memref<1x256xi32, #tpu.memory_space<vmem>>, vector<1x256xi32>
    %14 = vector.broadcast %12 : vector<256x1xi32> to vector<256x256xi32>
    %15 = vector.broadcast %13 : vector<1x256xi32> to vector<256x256xi32>
    %16 = arith.cmpi eq, %14, %15 : vector<256x256xi32>
    %cst_12 = arith.constant 4.000000e-01 : f32
    %17 = vector.broadcast %cst_12 : f32 to vector<256x256xf32>
    %18 = arith.cmpf olt, %11, %17 : vector<256x256xf32>
    %19 = arith.andi %16, %18 : vector<256x256xi1>
    %cst_13 = arith.constant 4.000000e-01 : f32
    %20 = vector.broadcast %cst_13 : f32 to vector<256x256xf32>
    %21 = arith.subf %20, %11 : vector<256x256xf32>
    %cst_14 = arith.constant 0.000000e+00 : f32
    %22 = vector.broadcast %cst_14 : f32 to vector<256x256xf32>
    %23 = arith.select %19, %21, %22 : vector<256x256xi1>, vector<256x256xf32>
    %cst_15 = arith.constant dense<true> : vector<256x256xi1>
    %24 = arith.xori %16, %cst_15 : vector<256x256xi1>
    %cst_16 = arith.constant 0.000000e+00 : f32
    %25 = vector.broadcast %cst_16 : f32 to vector<256x256xf32>
    %26 = arith.cmpf ogt, %11, %25 : vector<256x256xf32>
    %27 = arith.andi %24, %26 : vector<256x256xi1>
    %cst_17 = arith.constant 1.000000e+01 : f32
    %28 = vector.broadcast %cst_17 : f32 to vector<256x256xf32>
    %29 = arith.mulf %28, %11 : vector<256x256xf32>
    %30 = math.exp %29 : vector<256x256xf32>
    %cst_18 = arith.constant 0.000000e+00 : f32
    %31 = vector.broadcast %cst_18 : f32 to vector<256x256xf32>
    %32 = arith.select %27, %30, %31 : vector<256x256xi1>, vector<256x256xf32>
    %c0_19 = arith.constant 0 : index
    %c0_20 = arith.constant 0 : index
    %33 = vector.load %arg9[%c0_19, %c0_20] : memref<8x256xf32, #tpu.memory_space<vmem>>, vector<8x256xf32>
    %34 = vector.extract_strided_slice %32 {offsets = [0, 0], sizes = [8, 256], strides = [1, 1]} : vector<256x256xf32> to vector<8x256xf32>
    %35 = vector.extract_strided_slice %32 {offsets = [8, 0], sizes = [8, 256], strides = [1, 1]} : vector<256x256xf32> to vector<8x256xf32>
    %36 = arith.addf %34, %35 : vector<8x256xf32>
    %37 = vector.extract_strided_slice %32 {offsets = [16, 0], sizes = [8, 256], strides = [1, 1]} : vector<256x256xf32> to vector<8x256xf32>
    %38 = arith.addf %36, %37 : vector<8x256xf32>
    %39 = vector.extract_strided_slice %32 {offsets = [24, 0], sizes = [8, 256], strides = [1, 1]} : vector<256x256xf32> to vector<8x256xf32>
    %40 = arith.addf %38, %39 : vector<8x256xf32>
    %41 = vector.extract_strided_slice %32 {offsets = [32, 0], sizes = [8, 256], strides = [1, 1]} : vector<256x256xf32> to vector<8x256xf32>
    %42 = arith.addf %40, %41 : vector<8x256xf32>
    %43 = vector.extract_strided_slice %32 {offsets = [40, 0], sizes = [8, 256], strides = [1, 1]} : vector<256x256xf32> to vector<8x256xf32>
    %44 = arith.addf %42, %43 : vector<8x256xf32>
    %45 = vector.extract_strided_slice %32 {offsets = [48, 0], sizes = [8, 256], strides = [1, 1]} : vector<256x256xf32> to vector<8x256xf32>
    %46 = arith.addf %44, %45 : vector<8x256xf32>
    %47 = vector.extract_strided_slice %32 {offsets = [56, 0], sizes = [8, 256], strides = [1, 1]} : vector<256x256xf32> to vector<8x256xf32>
    %48 = arith.addf %46, %47 : vector<8x256xf32>
    %49 = vector.extract_strided_slice %32 {offsets = [64, 0], sizes = [8, 256], strides = [1, 1]} : vector<256x256xf32> to vector<8x256xf32>
    %50 = arith.addf %48, %49 : vector<8x256xf32>
    %51 = vector.extract_strided_slice %32 {offsets = [72, 0], sizes = [8, 256], strides = [1, 1]} : vector<256x256xf32> to vector<8x256xf32>
    %52 = arith.addf %50, %51 : vector<8x256xf32>
    %53 = vector.extract_strided_slice %32 {offsets = [80, 0], sizes = [8, 256], strides = [1, 1]} : vector<256x256xf32> to vector<8x256xf32>
    %54 = arith.addf %52, %53 : vector<8x256xf32>
    %55 = vector.extract_strided_slice %32 {offsets = [88, 0], sizes = [8, 256], strides = [1, 1]} : vector<256x256xf32> to vector<8x256xf32>
    %56 = arith.addf %54, %55 : vector<8x256xf32>
    %57 = vector.extract_strided_slice %32 {offsets = [96, 0], sizes = [8, 256], strides = [1, 1]} : vector<256x256xf32> to vector<8x256xf32>
    %58 = arith.addf %56, %57 : vector<8x256xf32>
    %59 = vector.extract_strided_slice %32 {offsets = [104, 0], sizes = [8, 256], strides = [1, 1]} : vector<256x256xf32> to vector<8x256xf32>
    %60 = arith.addf %58, %59 : vector<8x256xf32>
    %61 = vector.extract_strided_slice %32 {offsets = [112, 0], sizes = [8, 256], strides = [1, 1]} : vector<256x256xf32> to vector<8x256xf32>
    %62 = arith.addf %60, %61 : vector<8x256xf32>
    %63 = vector.extract_strided_slice %32 {offsets = [120, 0], sizes = [8, 256], strides = [1, 1]} : vector<256x256xf32> to vector<8x256xf32>
    %64 = arith.addf %62, %63 : vector<8x256xf32>
    %65 = vector.extract_strided_slice %32 {offsets = [128, 0], sizes = [8, 256], strides = [1, 1]} : vector<256x256xf32> to vector<8x256xf32>
    %66 = arith.addf %64, %65 : vector<8x256xf32>
    %67 = vector.extract_strided_slice %32 {offsets = [136, 0], sizes = [8, 256], strides = [1, 1]} : vector<256x256xf32> to vector<8x256xf32>
    %68 = arith.addf %66, %67 : vector<8x256xf32>
    %69 = vector.extract_strided_slice %32 {offsets = [144, 0], sizes = [8, 256], strides = [1, 1]} : vector<256x256xf32> to vector<8x256xf32>
    %70 = arith.addf %68, %69 : vector<8x256xf32>
    %71 = vector.extract_strided_slice %32 {offsets = [152, 0], sizes = [8, 256], strides = [1, 1]} : vector<256x256xf32> to vector<8x256xf32>
    %72 = arith.addf %70, %71 : vector<8x256xf32>
    %73 = vector.extract_strided_slice %32 {offsets = [160, 0], sizes = [8, 256], strides = [1, 1]} : vector<256x256xf32> to vector<8x256xf32>
    %74 = arith.addf %72, %73 : vector<8x256xf32>
    %75 = vector.extract_strided_slice %32 {offsets = [168, 0], sizes = [8, 256], strides = [1, 1]} : vector<256x256xf32> to vector<8x256xf32>
    %76 = arith.addf %74, %75 : vector<8x256xf32>
    %77 = vector.extract_strided_slice %32 {offsets = [176, 0], sizes = [8, 256], strides = [1, 1]} : vector<256x256xf32> to vector<8x256xf32>
    %78 = arith.addf %76, %77 : vector<8x256xf32>
    %79 = vector.extract_strided_slice %32 {offsets = [184, 0], sizes = [8, 256], strides = [1, 1]} : vector<256x256xf32> to vector<8x256xf32>
    %80 = arith.addf %78, %79 : vector<8x256xf32>
    %81 = vector.extract_strided_slice %32 {offsets = [192, 0], sizes = [8, 256], strides = [1, 1]} : vector<256x256xf32> to vector<8x256xf32>
    %82 = arith.addf %80, %81 : vector<8x256xf32>
    %83 = vector.extract_strided_slice %32 {offsets = [200, 0], sizes = [8, 256], strides = [1, 1]} : vector<256x256xf32> to vector<8x256xf32>
    %84 = arith.addf %82, %83 : vector<8x256xf32>
    %85 = vector.extract_strided_slice %32 {offsets = [208, 0], sizes = [8, 256], strides = [1, 1]} : vector<256x256xf32> to vector<8x256xf32>
    %86 = arith.addf %84, %85 : vector<8x256xf32>
    %87 = vector.extract_strided_slice %32 {offsets = [216, 0], sizes = [8, 256], strides = [1, 1]} : vector<256x256xf32> to vector<8x256xf32>
    %88 = arith.addf %86, %87 : vector<8x256xf32>
    %89 = vector.extract_strided_slice %32 {offsets = [224, 0], sizes = [8, 256], strides = [1, 1]} : vector<256x256xf32> to vector<8x256xf32>
    %90 = arith.addf %88, %89 : vector<8x256xf32>
    %91 = vector.extract_strided_slice %32 {offsets = [232, 0], sizes = [8, 256], strides = [1, 1]} : vector<256x256xf32> to vector<8x256xf32>
    %92 = arith.addf %90, %91 : vector<8x256xf32>
    %93 = vector.extract_strided_slice %32 {offsets = [240, 0], sizes = [8, 256], strides = [1, 1]} : vector<256x256xf32> to vector<8x256xf32>
    %94 = arith.addf %92, %93 : vector<8x256xf32>
    %95 = vector.extract_strided_slice %32 {offsets = [248, 0], sizes = [8, 256], strides = [1, 1]} : vector<256x256xf32> to vector<8x256xf32>
    %96 = arith.addf %94, %95 : vector<8x256xf32>
    %97 = arith.addf %33, %96 : vector<8x256xf32>
    %c0_21 = arith.constant 0 : index
    %c0_22 = arith.constant 0 : index
    %98 = vector.load %arg9[%c0_21, %c0_22] : memref<8x256xf32, #tpu.memory_space<vmem>>, vector<8x256xf32>
    tpu.vector_store %arg9[%c0_21, %c0_22], %97 {strides = array<i32>} : memref<8x256xf32, #tpu.memory_space<vmem>>, vector<8x256xf32>,
    %c0_23 = arith.constant 0 : index
    %c0_24 = arith.constant 0 : index
    %99 = vector.load %arg10[%c0_23, %c0_24] : memref<8x256xf32, #tpu.memory_space<vmem>>, vector<8x256xf32>
    %100 = arith.mulf %11, %32 : vector<256x256xf32>
    %101 = vector.extract_strided_slice %100 {offsets = [0, 0], sizes = [8, 256], strides = [1, 1]} : vector<256x256xf32> to vector<8x256xf32>
    %102 = vector.extract_strided_slice %100 {offsets = [8, 0], sizes = [8, 256], strides = [1, 1]} : vector<256x256xf32> to vector<8x256xf32>
    %103 = arith.addf %101, %102 : vector<8x256xf32>
    %104 = vector.extract_strided_slice %100 {offsets = [16, 0], sizes = [8, 256], strides = [1, 1]} : vector<256x256xf32> to vector<8x256xf32>
    %105 = arith.addf %103, %104 : vector<8x256xf32>
    %106 = vector.extract_strided_slice %100 {offsets = [24, 0], sizes = [8, 256], strides = [1, 1]} : vector<256x256xf32> to vector<8x256xf32>
    %107 = arith.addf %105, %106 : vector<8x256xf32>
    %108 = vector.extract_strided_slice %100 {offsets = [32, 0], sizes = [8, 256], strides = [1, 1]} : vector<256x256xf32> to vector<8x256xf32>
    %109 = arith.addf %107, %108 : vector<8x256xf32>
    %110 = vector.extract_strided_slice %100 {offsets = [40, 0], sizes = [8, 256], strides = [1, 1]} : vector<256x256xf32> to vector<8x256xf32>
    %111 = arith.addf %109, %110 : vector<8x256xf32>
    %112 = vector.extract_strided_slice %100 {offsets = [48, 0], sizes = [8, 256], strides = [1, 1]} : vector<256x256xf32> to vector<8x256xf32>
    %113 = arith.addf %111, %112 : vector<8x256xf32>
    %114 = vector.extract_strided_slice %100 {offsets = [56, 0], sizes = [8, 256], strides = [1, 1]} : vector<256x256xf32> to vector<8x256xf32>
    %115 = arith.addf %113, %114 : vector<8x256xf32>
    %116 = vector.extract_strided_slice %100 {offsets = [64, 0], sizes = [8, 256], strides = [1, 1]} : vector<256x256xf32> to vector<8x256xf32>
    %117 = arith.addf %115, %116 : vector<8x256xf32>
    %118 = vector.extract_strided_slice %100 {offsets = [72, 0], sizes = [8, 256], strides = [1, 1]} : vector<256x256xf32> to vector<8x256xf32>
    %119 = arith.addf %117, %118 : vector<8x256xf32>
    %120 = vector.extract_strided_slice %100 {offsets = [80, 0], sizes = [8, 256], strides = [1, 1]} : vector<256x256xf32> to vector<8x256xf32>
    %121 = arith.addf %119, %120 : vector<8x256xf32>
    %122 = vector.extract_strided_slice %100 {offsets = [88, 0], sizes = [8, 256], strides = [1, 1]} : vector<256x256xf32> to vector<8x256xf32>
    %123 = arith.addf %121, %122 : vector<8x256xf32>
    %124 = vector.extract_strided_slice %100 {offsets = [96, 0], sizes = [8, 256], strides = [1, 1]} : vector<256x256xf32> to vector<8x256xf32>
    %125 = arith.addf %123, %124 : vector<8x256xf32>
    %126 = vector.extract_strided_slice %100 {offsets = [104, 0], sizes = [8, 256], strides = [1, 1]} : vector<256x256xf32> to vector<8x256xf32>
    %127 = arith.addf %125, %126 : vector<8x256xf32>
    %128 = vector.extract_strided_slice %100 {offsets = [112, 0], sizes = [8, 256], strides = [1, 1]} : vector<256x256xf32> to vector<8x256xf32>
    %129 = arith.addf %127, %128 : vector<8x256xf32>
    %130 = vector.extract_strided_slice %100 {offsets = [120, 0], sizes = [8, 256], strides = [1, 1]} : vector<256x256xf32> to vector<8x256xf32>
    %131 = arith.addf %129, %130 : vector<8x256xf32>
    %132 = vector.extract_strided_slice %100 {offsets = [128, 0], sizes = [8, 256], strides = [1, 1]} : vector<256x256xf32> to vector<8x256xf32>
    %133 = arith.addf %131, %132 : vector<8x256xf32>
    %134 = vector.extract_strided_slice %100 {offsets = [136, 0], sizes = [8, 256], strides = [1, 1]} : vector<256x256xf32> to vector<8x256xf32>
    %135 = arith.addf %133, %134 : vector<8x256xf32>
    %136 = vector.extract_strided_slice %100 {offsets = [144, 0], sizes = [8, 256], strides = [1, 1]} : vector<256x256xf32> to vector<8x256xf32>
    %137 = arith.addf %135, %136 : vector<8x256xf32>
    %138 = vector.extract_strided_slice %100 {offsets = [152, 0], sizes = [8, 256], strides = [1, 1]} : vector<256x256xf32> to vector<8x256xf32>
    %139 = arith.addf %137, %138 : vector<8x256xf32>
    %140 = vector.extract_strided_slice %100 {offsets = [160, 0], sizes = [8, 256], strides = [1, 1]} : vector<256x256xf32> to vector<8x256xf32>
    %141 = arith.addf %139, %140 : vector<8x256xf32>
    %142 = vector.extract_strided_slice %100 {offsets = [168, 0], sizes = [8, 256], strides = [1, 1]} : vector<256x256xf32> to vector<8x256xf32>
    %143 = arith.addf %141, %142 : vector<8x256xf32>
    %144 = vector.extract_strided_slice %100 {offsets = [176, 0], sizes = [8, 256], strides = [1, 1]} : vector<256x256xf32> to vector<8x256xf32>
    %145 = arith.addf %143, %144 : vector<8x256xf32>
    %146 = vector.extract_strided_slice %100 {offsets = [184, 0], sizes = [8, 256], strides = [1, 1]} : vector<256x256xf32> to vector<8x256xf32>
    %147 = arith.addf %145, %146 : vector<8x256xf32>
    %148 = vector.extract_strided_slice %100 {offsets = [192, 0], sizes = [8, 256], strides = [1, 1]} : vector<256x256xf32> to vector<8x256xf32>
    %149 = arith.addf %147, %148 : vector<8x256xf32>
    %150 = vector.extract_strided_slice %100 {offsets = [200, 0], sizes = [8, 256], strides = [1, 1]} : vector<256x256xf32> to vector<8x256xf32>
    %151 = arith.addf %149, %150 : vector<8x256xf32>
    %152 = vector.extract_strided_slice %100 {offsets = [208, 0], sizes = [8, 256], strides = [1, 1]} : vector<256x256xf32> to vector<8x256xf32>
    %153 = arith.addf %151, %152 : vector<8x256xf32>
    %154 = vector.extract_strided_slice %100 {offsets = [216, 0], sizes = [8, 256], strides = [1, 1]} : vector<256x256xf32> to vector<8x256xf32>
    %155 = arith.addf %153, %154 : vector<8x256xf32>
    %156 = vector.extract_strided_slice %100 {offsets = [224, 0], sizes = [8, 256], strides = [1, 1]} : vector<256x256xf32> to vector<8x256xf32>
    %157 = arith.addf %155, %156 : vector<8x256xf32>
    %158 = vector.extract_strided_slice %100 {offsets = [232, 0], sizes = [8, 256], strides = [1, 1]} : vector<256x256xf32> to vector<8x256xf32>
    %159 = arith.addf %157, %158 : vector<8x256xf32>
    %160 = vector.extract_strided_slice %100 {offsets = [240, 0], sizes = [8, 256], strides = [1, 1]} : vector<256x256xf32> to vector<8x256xf32>
    %161 = arith.addf %159, %160 : vector<8x256xf32>
    %162 = vector.extract_strided_slice %100 {offsets = [248, 0], sizes = [8, 256], strides = [1, 1]} : vector<256x256xf32> to vector<8x256xf32>
    %163 = arith.addf %161, %162 : vector<8x256xf32>
    %164 = arith.addf %99, %163 : vector<8x256xf32>
    %c0_25 = arith.constant 0 : index
    %c0_26 = arith.constant 0 : index
    %165 = vector.load %arg10[%c0_25, %c0_26] : memref<8x256xf32, #tpu.memory_space<vmem>>, vector<8x256xf32>
    tpu.vector_store %arg10[%c0_25, %c0_26], %164 {strides = array<i32>} : memref<8x256xf32, #tpu.memory_space<vmem>>, vector<8x256xf32>,
    %c256_i32 = arith.constant 256 : i32
    %166 = arith.muli %arg1, %c256_i32 : i32
    %c1_i32 = arith.constant 1 : i32
    %167 = arith.addi %arg0, %c1_i32 : i32
    %c256_i32_27 = arith.constant 256 : i32
    %168 = arith.muli %167, %c256_i32_27 : i32
    %169 = arith.cmpi slt, %166, %168 : i32
    %c256_i32_28 = arith.constant 256 : i32
    %170 = arith.muli %arg0, %c256_i32_28 : i32
    %c1_i32_29 = arith.constant 1 : i32
    %171 = arith.addi %arg1, %c1_i32_29 : i32
    %c256_i32_30 = arith.constant 256 : i32
    %172 = arith.muli %171, %c256_i32_30 : i32
    %173 = arith.cmpi slt, %170, %172 : i32
    %174 = arith.andi %169, %173 : i1
    %175 = arith.extui %174 : i1 to i32
    %c0_i32_31 = arith.constant 0 : i32
    %176 = arith.cmpi ne, %175, %c0_i32_31 : i32
    scf.if %176 {
      %c256_i32_33 = arith.constant 256 : i32
      %180 = arith.muli %arg1, %c256_i32_33 : i32
      %181 = tpu.iota {dimensions = array<i32: 0>} : vector<256x256xi32>
      %182 = vector.broadcast %180 : i32 to vector<256x256xi32>
      %183 = arith.addi %182, %181 : vector<256x256xi32>
      %c256_i32_34 = arith.constant 256 : i32
      %184 = arith.muli %arg0, %c256_i32_34 : i32
      %185 = tpu.iota {dimensions = array<i32: 1>} : vector<256x256xi32>
      %186 = vector.broadcast %184 : i32 to vector<256x256xi32>
      %187 = arith.addi %186, %185 : vector<256x256xi32>
      %c0_35 = arith.constant 0 : index
      %c0_36 = arith.constant 0 : index
      %188 = vector.load %arg8[%c0_35, %c0_36] : memref<8x256xf32, #tpu.memory_space<vmem>>, vector<8x256xf32>
      %189 = arith.cmpi eq, %183, %187 : vector<256x256xi32>
      %cst_37 = arith.constant 0.000000e+00 : f32
      %190 = vector.broadcast %cst_37 : f32 to vector<256x256xf32>
      %191 = arith.select %189, %190, %23 : vector<256x256xi1>, vector<256x256xf32>
      %192 = vector.extract_strided_slice %191 {offsets = [0, 0], sizes = [8, 256], strides = [1, 1]} : vector<256x256xf32> to vector<8x256xf32>
      %193 = vector.extract_strided_slice %191 {offsets = [8, 0], sizes = [8, 256], strides = [1, 1]} : vector<256x256xf32> to vector<8x256xf32>
      %194 = arith.addf %192, %193 : vector<8x256xf32>
      %195 = vector.extract_strided_slice %191 {offsets = [16, 0], sizes = [8, 256], strides = [1, 1]} : vector<256x256xf32> to vector<8x256xf32>
      %196 = arith.addf %194, %195 : vector<8x256xf32>
      %197 = vector.extract_strided_slice %191 {offsets = [24, 0], sizes = [8, 256], strides = [1, 1]} : vector<256x256xf32> to vector<8x256xf32>
      %198 = arith.addf %196, %197 : vector<8x256xf32>
      %199 = vector.extract_strided_slice %191 {offsets = [32, 0], sizes = [8, 256], strides = [1, 1]} : vector<256x256xf32> to vector<8x256xf32>
      %200 = arith.addf %198, %199 : vector<8x256xf32>
      %201 = vector.extract_strided_slice %191 {offsets = [40, 0], sizes = [8, 256], strides = [1, 1]} : vector<256x256xf32> to vector<8x256xf32>
      %202 = arith.addf %200, %201 : vector<8x256xf32>
      %203 = vector.extract_strided_slice %191 {offsets = [48, 0], sizes = [8, 256], strides = [1, 1]} : vector<256x256xf32> to vector<8x256xf32>
      %204 = arith.addf %202, %203 : vector<8x256xf32>
      %205 = vector.extract_strided_slice %191 {offsets = [56, 0], sizes = [8, 256], strides = [1, 1]} : vector<256x256xf32> to vector<8x256xf32>
      %206 = arith.addf %204, %205 : vector<8x256xf32>
      %207 = vector.extract_strided_slice %191 {offsets = [64, 0], sizes = [8, 256], strides = [1, 1]} : vector<256x256xf32> to vector<8x256xf32>
      %208 = arith.addf %206, %207 : vector<8x256xf32>
      %209 = vector.extract_strided_slice %191 {offsets = [72, 0], sizes = [8, 256], strides = [1, 1]} : vector<256x256xf32> to vector<8x256xf32>
      %210 = arith.addf %208, %209 : vector<8x256xf32>
      %211 = vector.extract_strided_slice %191 {offsets = [80, 0], sizes = [8, 256], strides = [1, 1]} : vector<256x256xf32> to vector<8x256xf32>
      %212 = arith.addf %210, %211 : vector<8x256xf32>
      %213 = vector.extract_strided_slice %191 {offsets = [88, 0], sizes = [8, 256], strides = [1, 1]} : vector<256x256xf32> to vector<8x256xf32>
      %214 = arith.addf %212, %213 : vector<8x256xf32>
      %215 = vector.extract_strided_slice %191 {offsets = [96, 0], sizes = [8, 256], strides = [1, 1]} : vector<256x256xf32> to vector<8x256xf32>
      %216 = arith.addf %214, %215 : vector<8x256xf32>
      %217 = vector.extract_strided_slice %191 {offsets = [104, 0], sizes = [8, 256], strides = [1, 1]} : vector<256x256xf32> to vector<8x256xf32>
      %218 = arith.addf %216, %217 : vector<8x256xf32>
      %219 = vector.extract_strided_slice %191 {offsets = [112, 0], sizes = [8, 256], strides = [1, 1]} : vector<256x256xf32> to vector<8x256xf32>
      %220 = arith.addf %218, %219 : vector<8x256xf32>
      %221 = vector.extract_strided_slice %191 {offsets = [120, 0], sizes = [8, 256], strides = [1, 1]} : vector<256x256xf32> to vector<8x256xf32>
      %222 = arith.addf %220, %221 : vector<8x256xf32>
      %223 = vector.extract_strided_slice %191 {offsets = [128, 0], sizes = [8, 256], strides = [1, 1]} : vector<256x256xf32> to vector<8x256xf32>
      %224 = arith.addf %222, %223 : vector<8x256xf32>
      %225 = vector.extract_strided_slice %191 {offsets = [136, 0], sizes = [8, 256], strides = [1, 1]} : vector<256x256xf32> to vector<8x256xf32>
      %226 = arith.addf %224, %225 : vector<8x256xf32>
      %227 = vector.extract_strided_slice %191 {offsets = [144, 0], sizes = [8, 256], strides = [1, 1]} : vector<256x256xf32> to vector<8x256xf32>
      %228 = arith.addf %226, %227 : vector<8x256xf32>
      %229 = vector.extract_strided_slice %191 {offsets = [152, 0], sizes = [8, 256], strides = [1, 1]} : vector<256x256xf32> to vector<8x256xf32>
      %230 = arith.addf %228, %229 : vector<8x256xf32>
      %231 = vector.extract_strided_slice %191 {offsets = [160, 0], sizes = [8, 256], strides = [1, 1]} : vector<256x256xf32> to vector<8x256xf32>
      %232 = arith.addf %230, %231 : vector<8x256xf32>
      %233 = vector.extract_strided_slice %191 {offsets = [168, 0], sizes = [8, 256], strides = [1, 1]} : vector<256x256xf32> to vector<8x256xf32>
      %234 = arith.addf %232, %233 : vector<8x256xf32>
      %235 = vector.extract_strided_slice %191 {offsets = [176, 0], sizes = [8, 256], strides = [1, 1]} : vector<256x256xf32> to vector<8x256xf32>
      %236 = arith.addf %234, %235 : vector<8x256xf32>
      %237 = vector.extract_strided_slice %191 {offsets = [184, 0], sizes = [8, 256], strides = [1, 1]} : vector<256x256xf32> to vector<8x256xf32>
      %238 = arith.addf %236, %237 : vector<8x256xf32>
      %239 = vector.extract_strided_slice %191 {offsets = [192, 0], sizes = [8, 256], strides = [1, 1]} : vector<256x256xf32> to vector<8x256xf32>
      %240 = arith.addf %238, %239 : vector<8x256xf32>
      %241 = vector.extract_strided_slice %191 {offsets = [200, 0], sizes = [8, 256], strides = [1, 1]} : vector<256x256xf32> to vector<8x256xf32>
      %242 = arith.addf %240, %241 : vector<8x256xf32>
      %243 = vector.extract_strided_slice %191 {offsets = [208, 0], sizes = [8, 256], strides = [1, 1]} : vector<256x256xf32> to vector<8x256xf32>
      %244 = arith.addf %242, %243 : vector<8x256xf32>
      %245 = vector.extract_strided_slice %191 {offsets = [216, 0], sizes = [8, 256], strides = [1, 1]} : vector<256x256xf32> to vector<8x256xf32>
      %246 = arith.addf %244, %245 : vector<8x256xf32>
      %247 = vector.extract_strided_slice %191 {offsets = [224, 0], sizes = [8, 256], strides = [1, 1]} : vector<256x256xf32> to vector<8x256xf32>
      %248 = arith.addf %246, %247 : vector<8x256xf32>
      %249 = vector.extract_strided_slice %191 {offsets = [232, 0], sizes = [8, 256], strides = [1, 1]} : vector<256x256xf32> to vector<8x256xf32>
      %250 = arith.addf %248, %249 : vector<8x256xf32>
      %251 = vector.extract_strided_slice %191 {offsets = [240, 0], sizes = [8, 256], strides = [1, 1]} : vector<256x256xf32> to vector<8x256xf32>
      %252 = arith.addf %250, %251 : vector<8x256xf32>
      %253 = vector.extract_strided_slice %191 {offsets = [248, 0], sizes = [8, 256], strides = [1, 1]} : vector<256x256xf32> to vector<8x256xf32>
      %254 = arith.addf %252, %253 : vector<8x256xf32>
      %255 = arith.addf %188, %254 : vector<8x256xf32>
      %c0_38 = arith.constant 0 : index
      %c0_39 = arith.constant 0 : index
      %256 = vector.load %arg8[%c0_38, %c0_39] : memref<8x256xf32, #tpu.memory_space<vmem>>, vector<8x256xf32>
      tpu.vector_store %arg8[%c0_38, %c0_39], %255 {strides = array<i32>} : memref<8x256xf32, #tpu.memory_space<vmem>>, vector<8x256xf32>,
    } else {
    }
    %true = arith.constant true
    %177 = arith.xori %174, %true : i1
    %178 = arith.extui %177 : i1 to i32
    %c0_i32_32 = arith.constant 0 : i32
    %179 = arith.cmpi ne, %178, %c0_i32_32 : i32
    scf.if %179 {
      %c0_33 = arith.constant 0 : index
      %c0_34 = arith.constant 0 : index
      %180 = vector.load %arg8[%c0_33, %c0_34] : memref<8x256xf32, #tpu.memory_space<vmem>>, vector<8x256xf32>
      %181 = vector.extract_strided_slice %23 {offsets = [0, 0], sizes = [8, 256], strides = [1, 1]} : vector<256x256xf32> to vector<8x256xf32>
      %182 = vector.extract_strided_slice %23 {offsets = [8, 0], sizes = [8, 256], strides = [1, 1]} : vector<256x256xf32> to vector<8x256xf32>
      %183 = arith.addf %181, %182 : vector<8x256xf32>
      %184 = vector.extract_strided_slice %23 {offsets = [16, 0], sizes = [8, 256], strides = [1, 1]} : vector<256x256xf32> to vector<8x256xf32>
      %185 = arith.addf %183, %184 : vector<8x256xf32>
      %186 = vector.extract_strided_slice %23 {offsets = [24, 0], sizes = [8, 256], strides = [1, 1]} : vector<256x256xf32> to vector<8x256xf32>
      %187 = arith.addf %185, %186 : vector<8x256xf32>
      %188 = vector.extract_strided_slice %23 {offsets = [32, 0], sizes = [8, 256], strides = [1, 1]} : vector<256x256xf32> to vector<8x256xf32>
      %189 = arith.addf %187, %188 : vector<8x256xf32>
      %190 = vector.extract_strided_slice %23 {offsets = [40, 0], sizes = [8, 256], strides = [1, 1]} : vector<256x256xf32> to vector<8x256xf32>
      %191 = arith.addf %189, %190 : vector<8x256xf32>
      %192 = vector.extract_strided_slice %23 {offsets = [48, 0], sizes = [8, 256], strides = [1, 1]} : vector<256x256xf32> to vector<8x256xf32>
      %193 = arith.addf %191, %192 : vector<8x256xf32>
      %194 = vector.extract_strided_slice %23 {offsets = [56, 0], sizes = [8, 256], strides = [1, 1]} : vector<256x256xf32> to vector<8x256xf32>
      %195 = arith.addf %193, %194 : vector<8x256xf32>
      %196 = vector.extract_strided_slice %23 {offsets = [64, 0], sizes = [8, 256], strides = [1, 1]} : vector<256x256xf32> to vector<8x256xf32>
      %197 = arith.addf %195, %196 : vector<8x256xf32>
      %198 = vector.extract_strided_slice %23 {offsets = [72, 0], sizes = [8, 256], strides = [1, 1]} : vector<256x256xf32> to vector<8x256xf32>
      %199 = arith.addf %197, %198 : vector<8x256xf32>
      %200 = vector.extract_strided_slice %23 {offsets = [80, 0], sizes = [8, 256], strides = [1, 1]} : vector<256x256xf32> to vector<8x256xf32>
      %201 = arith.addf %199, %200 : vector<8x256xf32>
      %202 = vector.extract_strided_slice %23 {offsets = [88, 0], sizes = [8, 256], strides = [1, 1]} : vector<256x256xf32> to vector<8x256xf32>
      %203 = arith.addf %201, %202 : vector<8x256xf32>
      %204 = vector.extract_strided_slice %23 {offsets = [96, 0], sizes = [8, 256], strides = [1, 1]} : vector<256x256xf32> to vector<8x256xf32>
      %205 = arith.addf %203, %204 : vector<8x256xf32>
      %206 = vector.extract_strided_slice %23 {offsets = [104, 0], sizes = [8, 256], strides = [1, 1]} : vector<256x256xf32> to vector<8x256xf32>
      %207 = arith.addf %205, %206 : vector<8x256xf32>
      %208 = vector.extract_strided_slice %23 {offsets = [112, 0], sizes = [8, 256], strides = [1, 1]} : vector<256x256xf32> to vector<8x256xf32>
      %209 = arith.addf %207, %208 : vector<8x256xf32>
      %210 = vector.extract_strided_slice %23 {offsets = [120, 0], sizes = [8, 256], strides = [1, 1]} : vector<256x256xf32> to vector<8x256xf32>
      %211 = arith.addf %209, %210 : vector<8x256xf32>
      %212 = vector.extract_strided_slice %23 {offsets = [128, 0], sizes = [8, 256], strides = [1, 1]} : vector<256x256xf32> to vector<8x256xf32>
      %213 = arith.addf %211, %212 : vector<8x256xf32>
      %214 = vector.extract_strided_slice %23 {offsets = [136, 0], sizes = [8, 256], strides = [1, 1]} : vector<256x256xf32> to vector<8x256xf32>
      %215 = arith.addf %213, %214 : vector<8x256xf32>
      %216 = vector.extract_strided_slice %23 {offsets = [144, 0], sizes = [8, 256], strides = [1, 1]} : vector<256x256xf32> to vector<8x256xf32>
      %217 = arith.addf %215, %216 : vector<8x256xf32>
      %218 = vector.extract_strided_slice %23 {offsets = [152, 0], sizes = [8, 256], strides = [1, 1]} : vector<256x256xf32> to vector<8x256xf32>
      %219 = arith.addf %217, %218 : vector<8x256xf32>
      %220 = vector.extract_strided_slice %23 {offsets = [160, 0], sizes = [8, 256], strides = [1, 1]} : vector<256x256xf32> to vector<8x256xf32>
      %221 = arith.addf %219, %220 : vector<8x256xf32>
      %222 = vector.extract_strided_slice %23 {offsets = [168, 0], sizes = [8, 256], strides = [1, 1]} : vector<256x256xf32> to vector<8x256xf32>
      %223 = arith.addf %221, %222 : vector<8x256xf32>
      %224 = vector.extract_strided_slice %23 {offsets = [176, 0], sizes = [8, 256], strides = [1, 1]} : vector<256x256xf32> to vector<8x256xf32>
      %225 = arith.addf %223, %224 : vector<8x256xf32>
      %226 = vector.extract_strided_slice %23 {offsets = [184, 0], sizes = [8, 256], strides = [1, 1]} : vector<256x256xf32> to vector<8x256xf32>
      %227 = arith.addf %225, %226 : vector<8x256xf32>
      %228 = vector.extract_strided_slice %23 {offsets = [192, 0], sizes = [8, 256], strides = [1, 1]} : vector<256x256xf32> to vector<8x256xf32>
      %229 = arith.addf %227, %228 : vector<8x256xf32>
      %230 = vector.extract_strided_slice %23 {offsets = [200, 0], sizes = [8, 256], strides = [1, 1]} : vector<256x256xf32> to vector<8x256xf32>
      %231 = arith.addf %229, %230 : vector<8x256xf32>
      %232 = vector.extract_strided_slice %23 {offsets = [208, 0], sizes = [8, 256], strides = [1, 1]} : vector<256x256xf32> to vector<8x256xf32>
      %233 = arith.addf %231, %232 : vector<8x256xf32>
      %234 = vector.extract_strided_slice %23 {offsets = [216, 0], sizes = [8, 256], strides = [1, 1]} : vector<256x256xf32> to vector<8x256xf32>
      %235 = arith.addf %233, %234 : vector<8x256xf32>
      %236 = vector.extract_strided_slice %23 {offsets = [224, 0], sizes = [8, 256], strides = [1, 1]} : vector<256x256xf32> to vector<8x256xf32>
      %237 = arith.addf %235, %236 : vector<8x256xf32>
      %238 = vector.extract_strided_slice %23 {offsets = [232, 0], sizes = [8, 256], strides = [1, 1]} : vector<256x256xf32> to vector<8x256xf32>
      %239 = arith.addf %237, %238 : vector<8x256xf32>
      %240 = vector.extract_strided_slice %23 {offsets = [240, 0], sizes = [8, 256], strides = [1, 1]} : vector<256x256xf32> to vector<8x256xf32>
      %241 = arith.addf %239, %240 : vector<8x256xf32>
      %242 = vector.extract_strided_slice %23 {offsets = [248, 0], sizes = [8, 256], strides = [1, 1]} : vector<256x256xf32> to vector<8x256xf32>
      %243 = arith.addf %241, %242 : vector<8x256xf32>
      %244 = arith.addf %180, %243 : vector<8x256xf32>
      %c0_35 = arith.constant 0 : index
      %c0_36 = arith.constant 0 : index
      %245 = vector.load %arg8[%c0_35, %c0_36] : memref<8x256xf32, #tpu.memory_space<vmem>>, vector<8x256xf32>
      tpu.vector_store %arg8[%c0_35, %c0_36], %244 {strides = array<i32>} : memref<8x256xf32, #tpu.memory_space<vmem>>, vector<8x256xf32>,
    } else {
    }
    return
  }
  func.func @transform_0(%arg0: i32, %arg1: i32) -> (i32, i32) {
    %c0_i32 = arith.constant 0 : i32
    %c0_i32_0 = arith.constant 0 : i32
    return %arg1, %c0_i32 : i32, i32
  }
  func.func @transform_1(%arg0: i32, %arg1: i32) -> (i32, i32) {
    %c0_i32 = arith.constant 0 : i32
    %c0_i32_0 = arith.constant 0 : i32
    return %c0_i32, %arg0 : i32, i32
  }
  func.func @transform_2(%arg0: i32, %arg1: i32) -> (i32, i32) {
    %c0_i32 = arith.constant 0 : i32
    %c0_i32_0 = arith.constant 0 : i32
    return %arg1, %c0_i32 : i32, i32
  }
  func.func @transform_3(%arg0: i32, %arg1: i32) -> (i32, i32) {
    %c0_i32 = arith.constant 0 : i32
    %c0_i32_0 = arith.constant 0 : i32
    return %arg1, %c0_i32 : i32, i32
  }
  func.func @transform_4(%arg0: i32, %arg1: i32) -> (i32, i32) {
    %c0_i32 = arith.constant 0 : i32
    %c0_i32_0 = arith.constant 0 : i32
    return %c0_i32, %arg0 : i32, i32
  }
  func.func @transform_5(%arg0: i32, %arg1: i32) -> (i32, i32) {
    %c0_i32 = arith.constant 0 : i32
    %c0_i32_0 = arith.constant 0 : i32
    return %c0_i32, %arg0 : i32, i32
  }
  func.func @transform_6(%arg0: i32, %arg1: i32) -> (i32, i32) {
    %c0_i32 = arith.constant 0 : i32
    %c0_i32_0 = arith.constant 0 : i32
    return %c0_i32, %arg0 : i32, i32
  }
  func.func @transform_7(%arg0: i32, %arg1: i32) -> (i32, i32) {
    %c0_i32 = arith.constant 0 : i32
    %c0_i32_0 = arith.constant 0 : i32
    return %c0_i32, %arg0 : i32, i32
  }
  func.func @transform_8(%arg0: i32, %arg1: i32) -> (i32, i32) {
    %c0_i32 = arith.constant 0 : i32
    %c0_i32_0 = arith.constant 0 : i32
    return %c0_i32, %arg0 : i32, i32
  }
}

</mosaic_0001>

<llo_original>
// kernel: ranked_list_loss.1
$region0: #{ranked_list_loss.1}
  #allocation0 [shape = 'u32[]', space=smem, size = 0x4, offset = 0x4, fixed_abs, tag = 'smem constant byte address 0x4 - core index']
  #allocation1 [shape = 'u32[144,128]{1,0:T(1,128)}', space=vmem, size = 0x12000, scoped, tag = 'internal scratch']
  %s0 = inlined_call_operand.vmem [shape: bf16[256,32], index: 0, kind: input, shape index: {}]
  %s1 = inlined_call_operand.vmem [shape: bf16[32,256], index: 1, kind: input, shape index: {}]
  %s2 = inlined_call_operand.vmem [shape: f32[256,1], index: 2, kind: input, shape index: {}]
  %s3 = inlined_call_operand.vmem [shape: s32[256,1], index: 3, kind: input, shape index: {}]
  %s4 = inlined_call_operand.vmem [shape: f32[1,256], index: 4, kind: input, shape index: {}]
  %s5 = inlined_call_operand.vmem [shape: s32[1,256], index: 5, kind: input, shape index: {}]
  %s6 = inlined_call_operand.vmem [shape: f32[8,256], index: 6, kind: output, shape index: {0}]
  %s7 = inlined_call_operand.vmem [shape: f32[8,256], index: 7, kind: output, shape index: {1}]
  %s8 = inlined_call_operand.vmem [shape: f32[8,256], index: 8, kind: output, shape index: {2}]
  %9 = xla_tuple %s6, %s7, %s8
  %s10 = sld [smem:[#allocation0]]
  $region62: #{ranked_list_loss.1} parent=0
    _
  %s12 = ssub.s32 1, %s10
  %s13 = scalar_select 0, %s12, %s10
  // Predicated region
  $region2: #{ranked_list_loss.1} parent=0 // pred_check
    _
  $region3: #{ranked_list_loss.1} parent=0 // pred_check_branch
    %15 = sbr.rel (0) target = $region5
  $region4: #{ranked_list_loss.1} parent=0 // pred_region
    _
  $region5: #{ranked_list_loss.1} parent=0 // pred_fallthru
    _
  // Predicated region
  $region6: #{ranked_list_loss.1} parent=0 // pred_check
    _
  $region7: #{ranked_list_loss.1} parent=0 // pred_check_branch
    %17 = sbr.rel (0) target = $region9
  $region8: #{ranked_list_loss.1} parent=0 // pred_region
    _
  $region9: #{ranked_list_loss.1} parent=0 // pred_fallthru
    _
  // Predicated region
  $region10: #{ranked_list_loss.1} parent=0 // pred_check
    _
  $region11: #{ranked_list_loss.1} parent=0 // pred_check_branch
    %19 = sbr.rel (0) target = $region13
  $region12: #{ranked_list_loss.1} parent=0 // pred_region
    _
  $region13: #{ranked_list_loss.1} parent=0 // pred_fallthru
    _
  // Predicated region
  $region14: #{ranked_list_loss.1} parent=0 // pred_check
    _
  $region15: #{ranked_list_loss.1} parent=0 // pred_check_branch
    %21 = sbr.rel (0) target = $region17
  $region16: #{ranked_list_loss.1} parent=0 // pred_region
    _
  $region17: #{ranked_list_loss.1} parent=0 // pred_fallthru
    _
  // Predicated region
  $region18: #{ranked_list_loss.1} parent=0 // pred_check
    _
  $region19: #{ranked_list_loss.1} parent=0 // pred_check_branch
    %23 = sbr.rel (0) target = $region21
  $region20: #{ranked_list_loss.1} parent=0 // pred_region
    _
  $region21: #{ranked_list_loss.1} parent=0 // pred_fallthru
    _
  // Predicated region
  $region22: #{ranked_list_loss.1} parent=0 // pred_check
    _
  $region23: #{ranked_list_loss.1} parent=0 // pred_check_branch
    %25 = sbr.rel (0) target = $region25
  $region24: #{ranked_list_loss.1} parent=0 // pred_region
    _
  $region25: #{ranked_list_loss.1} parent=0 // pred_fallthru
    _
  %p27 = scmp.eq.s32.totalorder 0, 0
  // Predicated region
  $region26: #{ranked_list_loss.1} parent=0 // pred_check
    %p28 = pneg %p27
  $region27: #{ranked_list_loss.1} parent=0 // pred_check_branch
    %30 = sbr.rel (%p28) target = $region29
  $region28: #{ranked_list_loss.1} parent=0 // pred_region
    %31 = vst [vmem:[%s6] sm:$0xff] 0.0
    %32 = vst [vmem:[%s6 + $0x8] sm:$0xff] 0.0
    %33 = vst [vmem:[%s7] sm:$0xff] 0.0
    %34 = vst [vmem:[%s7 + $0x8] sm:$0xff] 0.0
    %35 = vst [vmem:[%s8] sm:$0xff] 0.0
    %36 = vst [vmem:[%s8 + $0x8] sm:$0xff] 0.0
  $region29: #{ranked_list_loss.1} parent=0 // pred_fallthru
    _
  %v37 = vld [vmem:[%s0] sm:$0xf]
  %v38 = vld [vmem:[%s0 + $0x4] sm:$0xf]
  %v39 = vld [vmem:[%s0 + $0x8] sm:$0xf]
  %v40 = vld [vmem:[%s0 + $0xc] sm:$0xf]
  %v41 = vld [vmem:[%s0 + $0x10] sm:$0xf]
  %v42 = vld [vmem:[%s0 + $0x14] sm:$0xf]
  %v43 = vld [vmem:[%s0 + $0x18] sm:$0xf]
  %v44 = vld [vmem:[%s0 + $0x1c] sm:$0xf]
  %v45 = vld [vmem:[%s0 + $0x20] sm:$0xf]
  %v46 = vld [vmem:[%s0 + $0x24] sm:$0xf]
  %v47 = vld [vmem:[%s0 + $0x28] sm:$0xf]
  %v48 = vld [vmem:[%s0 + $0x2c] sm:$0xf]
  %v49 = vld [vmem:[%s0 + $0x30] sm:$0xf]
  %v50 = vld [vmem:[%s0 + $0x34] sm:$0xf]
  %v51 = vld [vmem:[%s0 + $0x38] sm:$0xf]
  %v52 = vld [vmem:[%s0 + $0x3c] sm:$0xf]
  %v53 = vld [vmem:[%s0 + $0x40] sm:$0xf]
  %v54 = vld [vmem:[%s0 + $0x44] sm:$0xf]
  %v55 = vld [vmem:[%s0 + $0x48] sm:$0xf]
  %v56 = vld [vmem:[%s0 + $0x4c] sm:$0xf]
  %v57 = vld [vmem:[%s0 + $0x50] sm:$0xf]
  %v58 = vld [vmem:[%s0 + $0x54] sm:$0xf]
  %v59 = vld [vmem:[%s0 + $0x58] sm:$0xf]
  %v60 = vld [vmem:[%s0 + $0x5c] sm:$0xf]
  %v61 = vld [vmem:[%s0 + $0x60] sm:$0xf]
  %v62 = vld [vmem:[%s0 + $0x64] sm:$0xf]
  %v63 = vld [vmem:[%s0 + $0x68] sm:$0xf]
  %v64 = vld [vmem:[%s0 + $0x6c] sm:$0xf]
  %v65 = vld [vmem:[%s0 + $0x70] sm:$0xf]
  %v66 = vld [vmem:[%s0 + $0x74] sm:$0xf]
  %v67 = vld [vmem:[%s0 + $0x78] sm:$0xf]
  %v68 = vld [vmem:[%s0 + $0x7c] sm:$0xf]
  %v69 = vld [vmem:[%s1] sm:$0xff]
  %v70 = vld [vmem:[%s1 + $0x8] sm:$0xff]
  %v71 = vld [vmem:[%s1 + $0x10] sm:$0xff]
  %v72 = vld [vmem:[%s1 + $0x18] sm:$0xff]
  %v73 = vld [vmem:[%s4] sm:$0x3]
  %v75 = vlaneseq
  %v76 = vshrl.u32 %v75, 7
  %v77 = vsub.s32 0, %v76
  %v78 = vrot.slane %v73, %v77
  %v79 = vlaneseq
  %v80 = vshrl.u32 %v79, 7
  %v81 = vsub.s32 1, %v80
  %v82 = vrot.slane %v73, %v81
  %v117 = vunpack.c.l.b16 %v37
  %v118 = vunpack.c.l.b16 %v38
  %v119 = vunpack.c.l.b16 %v39
  %v120 = vunpack.c.l.b16 %v40
  %v121 = vunpack.c.l.b16 %v41
  %v122 = vunpack.c.l.b16 %v42
  %v123 = vunpack.c.l.b16 %v43
  %v124 = vunpack.c.l.b16 %v44
  %v125 = vunpack.c.l.b16 %v45
  %v126 = vunpack.c.l.b16 %v46
  %v127 = vunpack.c.l.b16 %v47
  %v128 = vunpack.c.l.b16 %v48
  %v129 = vunpack.c.l.b16 %v49
  %v130 = vunpack.c.l.b16 %v50
  %v131 = vunpack.c.l.b16 %v51
  %v132 = vunpack.c.l.b16 %v52
  %v133 = vunpack.c.l.b16 %v53
  %v134 = vunpack.c.l.b16 %v54
  %v135 = vunpack.c.l.b16 %v55
  %v136 = vunpack.c.l.b16 %v56
  %v137 = vunpack.c.l.b16 %v57
  %v138 = vunpack.c.l.b16 %v58
  %v139 = vunpack.c.l.b16 %v59
  %v140 = vunpack.c.l.b16 %v60
  %v141 = vunpack.c.l.b16 %v61
  %v142 = vunpack.c.l.b16 %v62
  %v143 = vunpack.c.l.b16 %v63
  %v144 = vunpack.c.l.b16 %v64
  %v145 = vunpack.c.l.b16 %v65
  %v146 = vunpack.c.l.b16 %v66
  %v147 = vunpack.c.l.b16 %v67
  %v148 = vunpack.c.l.b16 %v68
  %v149 = vpack.c.b16 %v118, %v117
  %v150 = vpack.c.b16 %v120, %v119
  %v151 = vpack.c.b16 %v122, %v121
  %v152 = vpack.c.b16 %v124, %v123
  %v153 = vpack.c.b16 %v126, %v125
  %v154 = vpack.c.b16 %v128, %v127
  %v155 = vpack.c.b16 %v130, %v129
  %v156 = vpack.c.b16 %v132, %v131
  %v157 = vpack.c.b16 %v134, %v133
  %v158 = vpack.c.b16 %v136, %v135
  %v159 = vpack.c.b16 %v138, %v137
  %v160 = vpack.c.b16 %v140, %v139
  %v161 = vpack.c.b16 %v142, %v141
  %v162 = vpack.c.b16 %v144, %v143
  %v163 = vpack.c.b16 %v146, %v145
  %v164 = vpack.c.b16 %v148, %v147
  %v169 = vunpack.c.l.b16 %v69
  %v170 = vunpack.c.h.b16 %v69
  %v171 = vunpack.c.l.b16 %v70
  %v172 = vunpack.c.h.b16 %v70
  %v173 = vunpack.c.l.b16 %v71
  %v174 = vunpack.c.h.b16 %v71
  %v175 = vunpack.c.l.b16 %v72
  %v176 = vunpack.c.h.b16 %v72
  %v177 = vpack.c.b16 %v171, %v169
  %v178 = vpack.c.b16 %v172, %v170
  %v179 = vpack.c.b16 %v175, %v173
  %v180 = vpack.c.b16 %v176, %v174
  %vm185 = vcmask 261120
  %v187 = vsel %vm185, %v149, 0
  %v190 = vsel %vm185, %v150, 0
  %v193 = vsel %vm185, %v151, 0
  %v196 = vsel %vm185, %v152, 0
  %v199 = vsel %vm185, %v153, 0
  %v202 = vsel %vm185, %v154, 0
  %v205 = vsel %vm185, %v155, 0
  %v208 = vsel %vm185, %v156, 0
  %v211 = vsel %vm185, %v157, 0
  %v214 = vsel %vm185, %v158, 0
  %v217 = vsel %vm185, %v159, 0
  %v220 = vsel %vm185, %v160, 0
  %v223 = vsel %vm185, %v161, 0
  %v226 = vsel %vm185, %v162, 0
  %v229 = vsel %vm185, %v163, 0
  %v232 = vsel %vm185, %v164, 0
  %234 = vmatprep.subr.bf16.mxu0 %v178
  %235 = vmatpush1.bf16.msra.mxu0 %v177
  %236 = vmatprep.subr.bf16.mxu0 %v180
  %237 = vmatpush1.bf16.msra.mxu0 %v179
  %238 = vmatprep.subr.bf16.mxu0 0
  %239 = vmatpush1.bf16.msra.mxu0 0
  %240 = vmatprep.subr.bf16.mxu0 0
  %241 = vmatpush1.bf16.msra.mxu0 0
  %242 = vmatprep.subr.bf16.mxu0 0
  %243 = vmatpush1.bf16.msra.mxu0 0
  %244 = vmatprep.subr.bf16.mxu0 0
  %245 = vmatpush1.bf16.msra.mxu0 0
  %246 = vmatprep.subr.bf16.mxu0 0
  %247 = vmatpush1.bf16.msra.mxu0 0
  %248 = vmatprep.subr.bf16.mxu0 0
  %249 = vmatpush1.bf16.msra.mxu0 0
  %250 = vmatprep.subr.bf16.mxu0 0
  %251 = vmatpush1.bf16.msra.mxu0 0
  %252 = vmatprep.subr.bf16.mxu0 0
  %253 = vmatpush1.bf16.msra.mxu0 0
  %254 = vmatprep.subr.bf16.mxu0 0
  %255 = vmatpush1.bf16.msra.mxu0 0
  %256 = vmatprep.subr.bf16.mxu0 0
  %257 = vmatpush1.bf16.msra.mxu0 0
  %258 = vmatprep.subr.bf16.mxu0 0
  %259 = vmatpush1.bf16.msra.mxu0 0
  %260 = vmatprep.subr.bf16.mxu0 0
  %261 = vmatpush1.bf16.msra.mxu0 0
  %262 = vmatprep.subr.bf16.mxu0 0
  %263 = vmatpush1.bf16.msra.mxu0 0
  %264 = vmatprep.subr.bf16.mxu0 0
  %265 = vmatpush1.bf16.msra.mxu0 0
  %266 = vmatprep.mubr.bf16.mxu0 0
  %267 = vmatmul.mubr.bf16.gmra.mrb[0].mxu0 %v187
  %v268 = vpop.f32.mrb[0].mxu0
  %v269 = vadd.f32 %v78, %v268
  %v270 = vpop.f32.mrb[0].mxu0
  %v271 = vadd.f32 %v82, %v270
  %v272 = vpop.f32.mrb[0].mxu0
  %v273 = vadd.f32 %v78, %v272
  %v274 = vpop.f32.mrb[0].mxu0
  %v275 = vadd.f32 %v82, %v274
  %276 = vmatprep.mubr.bf16.mxu0 0
  %277 = vmatmul.mubr.bf16.gmra.mrb[0].mxu0 %v190
  %v278 = vpop.f32.mrb[0].mxu0
  %v279 = vadd.f32 %v78, %v278
  %v280 = vpop.f32.mrb[0].mxu0
  %v281 = vadd.f32 %v82, %v280
  %v282 = vpop.f32.mrb[0].mxu0
  %v283 = vadd.f32 %v78, %v282
  %v284 = vpop.f32.mrb[0].mxu0
  %v285 = vadd.f32 %v82, %v284
  %286 = vmatprep.mubr.bf16.mxu0 0
  %287 = vmatmul.mubr.bf16.gmra.mrb[0].mxu0 %v193
  %v288 = vpop.f32.mrb[0].mxu0
  %v289 = vadd.f32 %v78, %v288
  %v290 = vpop.f32.mrb[0].mxu0
  %v291 = vadd.f32 %v82, %v290
  %v292 = vpop.f32.mrb[0].mxu0
  %v293 = vadd.f32 %v78, %v292
  %v294 = vpop.f32.mrb[0].mxu0
  %v295 = vadd.f32 %v82, %v294
  %296 = vmatprep.mubr.bf16.mxu0 0
  %297 = vmatmul.mubr.bf16.gmra.mrb[0].mxu0 %v196
  %v298 = vpop.f32.mrb[0].mxu0
  %v299 = vadd.f32 %v78, %v298
  %v300 = vpop.f32.mrb[0].mxu0
  %v301 = vadd.f32 %v82, %v300
  %v302 = vpop.f32.mrb[0].mxu0
  %v303 = vadd.f32 %v78, %v302
  %v304 = vpop.f32.mrb[0].mxu0
  %v305 = vadd.f32 %v82, %v304
  %306 = vmatprep.mubr.bf16.mxu0 0
  %307 = vmatmul.mubr.bf16.gmra.mrb[0].mxu0 %v199
  %v308 = vpop.f32.mrb[0].mxu0
  %v309 = vadd.f32 %v78, %v308
  %v310 = vpop.f32.mrb[0].mxu0
  %v311 = vadd.f32 %v82, %v310
  %v312 = vpop.f32.mrb[0].mxu0
  %v313 = vadd.f32 %v78, %v312
  %v314 = vpop.f32.mrb[0].mxu0
  %v315 = vadd.f32 %v82, %v314
  %316 = vmatprep.mubr.bf16.mxu0 0
  %317 = vmatmul.mubr.bf16.gmra.mrb[0].mxu0 %v202
  %v318 = vpop.f32.mrb[0].mxu0
  %v319 = vadd.f32 %v78, %v318
  %v320 = vpop.f32.mrb[0].mxu0
  %v321 = vadd.f32 %v82, %v320
  %v322 = vpop.f32.mrb[0].mxu0
  %v323 = vadd.f32 %v78, %v322
  %v324 = vpop.f32.mrb[0].mxu0
  %v325 = vadd.f32 %v82, %v324
  %326 = vmatprep.mubr.bf16.mxu0 0
  %327 = vmatmul.mubr.bf16.gmra.mrb[0].mxu0 %v205
  %v328 = vpop.f32.mrb[0].mxu0
  %v329 = vadd.f32 %v78, %v328
  %v330 = vpop.f32.mrb[0].mxu0
  %v331 = vadd.f32 %v82, %v330
  %v332 = vpop.f32.mrb[0].mxu0
  %v333 = vadd.f32 %v78, %v332
  %v334 = vpop.f32.mrb[0].mxu0
  %v335 = vadd.f32 %v82, %v334
  %336 = vmatprep.mubr.bf16.mxu0 0
  %337 = vmatmul.mubr.bf16.gmra.mrb[0].mxu0 %v208
  %v338 = vpop.f32.mrb[0].mxu0
  %v339 = vadd.f32 %v78, %v338
  %v340 = vpop.f32.mrb[0].mxu0
  %v341 = vadd.f32 %v82, %v340
  %v342 = vpop.f32.mrb[0].mxu0
  %v343 = vadd.f32 %v78, %v342
  %v344 = vpop.f32.mrb[0].mxu0
  %v345 = vadd.f32 %v82, %v344
  %346 = vmatprep.mubr.bf16.mxu0 0
  %347 = vmatmul.mubr.bf16.gmra.mrb[0].mxu0 %v211
  %v348 = vpop.f32.mrb[0].mxu0
  %v349 = vadd.f32 %v78, %v348
  %v350 = vpop.f32.mrb[0].mxu0
  %v351 = vadd.f32 %v82, %v350
  %v352 = vpop.f32.mrb[0].mxu0
  %v353 = vadd.f32 %v78, %v352
  %v354 = vpop.f32.mrb[0].mxu0
  %v355 = vadd.f32 %v82, %v354
  %356 = vmatprep.mubr.bf16.mxu0 0
  %357 = vmatmul.mubr.bf16.gmra.mrb[0].mxu0 %v214
  %v358 = vpop.f32.mrb[0].mxu0
  %v359 = vadd.f32 %v78, %v358
  %v360 = vpop.f32.mrb[0].mxu0
  %v361 = vadd.f32 %v82, %v360
  %v362 = vpop.f32.mrb[0].mxu0
  %v363 = vadd.f32 %v78, %v362
  %v364 = vpop.f32.mrb[0].mxu0
  %v365 = vadd.f32 %v82, %v364
  %366 = vmatprep.mubr.bf16.mxu0 0
  %367 = vmatmul.mubr.bf16.gmra.mrb[0].mxu0 %v217
  %v368 = vpop.f32.mrb[0].mxu0
  %v369 = vadd.f32 %v78, %v368
  %v370 = vpop.f32.mrb[0].mxu0
  %v371 = vadd.f32 %v82, %v370
  %v372 = vpop.f32.mrb[0].mxu0
  %v373 = vadd.f32 %v78, %v372
  %v374 = vpop.f32.mrb[0].mxu0
  %v375 = vadd.f32 %v82, %v374
  %376 = vmatprep.mubr.bf16.mxu0 0
  %377 = vmatmul.mubr.bf16.gmra.mrb[0].mxu0 %v220
  %v378 = vpop.f32.mrb[0].mxu0
  %v379 = vadd.f32 %v78, %v378
  %v380 = vpop.f32.mrb[0].mxu0
  %v381 = vadd.f32 %v82, %v380
  %v382 = vpop.f32.mrb[0].mxu0
  %v383 = vadd.f32 %v78, %v382
  %v384 = vpop.f32.mrb[0].mxu0
  %v385 = vadd.f32 %v82, %v384
  %386 = vmatprep.mubr.bf16.mxu0 0
  %387 = vmatmul.mubr.bf16.gmra.mrb[0].mxu0 %v223
  %v388 = vpop.f32.mrb[0].mxu0
  %v389 = vadd.f32 %v78, %v388
  %v390 = vpop.f32.mrb[0].mxu0
  %v391 = vadd.f32 %v82, %v390
  %v392 = vpop.f32.mrb[0].mxu0
  %v393 = vadd.f32 %v78, %v392
  %v394 = vpop.f32.mrb[0].mxu0
  %v395 = vadd.f32 %v82, %v394
  %396 = vmatprep.mubr.bf16.mxu0 0
  %397 = vmatmul.mubr.bf16.gmra.mrb[0].mxu0 %v226
  %v398 = vpop.f32.mrb[0].mxu0
  %v399 = vadd.f32 %v78, %v398
  %v400 = vpop.f32.mrb[0].mxu0
  %v401 = vadd.f32 %v82, %v400
  %v402 = vpop.f32.mrb[0].mxu0
  %v403 = vadd.f32 %v78, %v402
  %v404 = vpop.f32.mrb[0].mxu0
  %v405 = vadd.f32 %v82, %v404
  %406 = vmatprep.mubr.bf16.mxu0 0
  %407 = vmatmul.mubr.bf16.gmra.mrb[0].mxu0 %v229
  %v408 = vpop.f32.mrb[0].mxu0
  %v409 = vadd.f32 %v78, %v408
  %v410 = vpop.f32.mrb[0].mxu0
  %v411 = vadd.f32 %v82, %v410
  %v412 = vpop.f32.mrb[0].mxu0
  %v413 = vadd.f32 %v78, %v412
  %v414 = vpop.f32.mrb[0].mxu0
  %v415 = vadd.f32 %v82, %v414
  %416 = vmatprep.mubr.bf16.mxu0 0
  %417 = vmatmul.mubr.bf16.gmra.mrb[0].mxu0 %v232
  %v418 = vpop.f32.mrb[0].mxu0
  %v419 = vadd.f32 %v78, %v418
  %v420 = vpop.f32.mrb[0].mxu0
  %v421 = vadd.f32 %v82, %v420
  %v422 = vpop.f32.mrb[0].mxu0
  %v423 = vadd.f32 %v78, %v422
  %v424 = vpop.f32.mrb[0].mxu0
  %v425 = vadd.f32 %v82, %v424
  %426 = vdwg.mxu0
  %v427 = vld [vmem:[%s2] sm:$0xff]
  %v428 = vld [vmem:[%s2 + $0x8] sm:$0xff]
  %v429 = vld [vmem:[%s2 + $0x10] sm:$0xff]
  %v430 = vld [vmem:[%s2 + $0x18] sm:$0xff]
  %v431 = vld [vmem:[%s2 + $0x20] sm:$0xff]
  %v432 = vld [vmem:[%s2 + $0x28] sm:$0xff]
  %v433 = vld [vmem:[%s2 + $0x30] sm:$0xff]
  %v434 = vld [vmem:[%s2 + $0x38] sm:$0xff]
  %v435 = vld [vmem:[%s2 + $0x40] sm:$0xff]
  %v436 = vld [vmem:[%s2 + $0x48] sm:$0xff]
  %v437 = vld [vmem:[%s2 + $0x50] sm:$0xff]
  %v438 = vld [vmem:[%s2 + $0x58] sm:$0xff]
  %v439 = vld [vmem:[%s2 + $0x60] sm:$0xff]
  %v440 = vld [vmem:[%s2 + $0x68] sm:$0xff]
  %v441 = vld [vmem:[%s2 + $0x70] sm:$0xff]
  %v442 = vld [vmem:[%s2 + $0x78] sm:$0xff]
  %v443 = vld [vmem:[%s2 + $0x80] sm:$0xff]
  %v444 = vld [vmem:[%s2 + $0x88] sm:$0xff]
  %v445 = vld [vmem:[%s2 + $0x90] sm:$0xff]
  %v446 = vld [vmem:[%s2 + $0x98] sm:$0xff]
  %v447 = vld [vmem:[%s2 + $0xa0] sm:$0xff]
  %v448 = vld [vmem:[%s2 + $0xa8] sm:$0xff]
  %v449 = vld [vmem:[%s2 + $0xb0] sm:$0xff]
  %v450 = vld [vmem:[%s2 + $0xb8] sm:$0xff]
  %v451 = vld [vmem:[%s2 + $0xc0] sm:$0xff]
  %v452 = vld [vmem:[%s2 + $0xc8] sm:$0xff]
  %v453 = vld [vmem:[%s2 + $0xd0] sm:$0xff]
  %v454 = vld [vmem:[%s2 + $0xd8] sm:$0xff]
  %v455 = vld [vmem:[%s2 + $0xe0] sm:$0xff]
  %v456 = vld [vmem:[%s2 + $0xe8] sm:$0xff]
  %v457 = vld [vmem:[%s2 + $0xf0] sm:$0xff]
  %v458 = vld [vmem:[%s2 + $0xf8] sm:$0xff]
  %460 = vset.pattern.permute.xlu0 0
  %461 = vperm.xlu0 %460, %v427
  %v462 = vpop.permute.xlu0 %461
  %465 = vset.pattern.permute.xlu0 0
  %466 = vperm.xlu0 %465, %v428
  %v467 = vpop.permute.xlu0 %466
  %470 = vset.pattern.permute.xlu0 0
  %471 = vperm.xlu0 %470, %v429
  %v472 = vpop.permute.xlu0 %471
  %475 = vset.pattern.permute.xlu0 0
  %476 = vperm.xlu0 %475, %v430
  %v477 = vpop.permute.xlu0 %476
  %480 = vset.pattern.permute.xlu0 0
  %481 = vperm.xlu0 %480, %v431
  %v482 = vpop.permute.xlu0 %481
  %485 = vset.pattern.permute.xlu0 0
  %486 = vperm.xlu0 %485, %v432
  %v487 = vpop.permute.xlu0 %486
  %490 = vset.pattern.permute.xlu0 0
  %491 = vperm.xlu0 %490, %v433
  %v492 = vpop.permute.xlu0 %491
  %495 = vset.pattern.permute.xlu0 0
  %496 = vperm.xlu0 %495, %v434
  %v497 = vpop.permute.xlu0 %496
  %500 = vset.pattern.permute.xlu0 0
  %501 = vperm.xlu0 %500, %v435
  %v502 = vpop.permute.xlu0 %501
  %505 = vset.pattern.permute.xlu0 0
  %506 = vperm.xlu0 %505, %v436
  %v507 = vpop.permute.xlu0 %506
  %510 = vset.pattern.permute.xlu0 0
  %511 = vperm.xlu0 %510, %v437
  %v512 = vpop.permute.xlu0 %511
  %515 = vset.pattern.permute.xlu0 0
  %516 = vperm.xlu0 %515, %v438
  %v517 = vpop.permute.xlu0 %516
  %520 = vset.pattern.permute.xlu0 0
  %521 = vperm.xlu0 %520, %v439
  %v522 = vpop.permute.xlu0 %521
  %525 = vset.pattern.permute.xlu0 0
  %526 = vperm.xlu0 %525, %v440
  %v527 = vpop.permute.xlu0 %526
  %530 = vset.pattern.permute.xlu0 0
  %531 = vperm.xlu0 %530, %v441
  %v532 = vpop.permute.xlu0 %531
  %535 = vset.pattern.permute.xlu0 0
  %536 = vperm.xlu0 %535, %v442
  %v537 = vpop.permute.xlu0 %536
  %540 = vset.pattern.permute.xlu0 0
  %541 = vperm.xlu0 %540, %v443
  %v542 = vpop.permute.xlu0 %541
  %545 = vset.pattern.permute.xlu0 0
  %546 = vperm.xlu0 %545, %v444
  %v547 = vpop.permute.xlu0 %546
  %550 = vset.pattern.permute.xlu0 0
  %551 = vperm.xlu0 %550, %v445
  %v552 = vpop.permute.xlu0 %551
  %555 = vset.pattern.permute.xlu0 0
  %556 = vperm.xlu0 %555, %v446
  %v557 = vpop.permute.xlu0 %556
  %560 = vset.pattern.permute.xlu0 0
  %561 = vperm.xlu0 %560, %v447
  %v562 = vpop.permute.xlu0 %561
  %565 = vset.pattern.permute.xlu0 0
  %566 = vperm.xlu0 %565, %v448
  %v567 = vpop.permute.xlu0 %566
  %570 = vset.pattern.permute.xlu0 0
  %571 = vperm.xlu0 %570, %v449
  %v572 = vpop.permute.xlu0 %571
  %575 = vset.pattern.permute.xlu0 0
  %576 = vperm.xlu0 %575, %v450
  %v577 = vpop.permute.xlu0 %576
  %580 = vset.pattern.permute.xlu0 0
  %581 = vperm.xlu0 %580, %v451
  %v582 = vpop.permute.xlu0 %581
  %585 = vset.pattern.permute.xlu0 0
  %586 = vperm.xlu0 %585, %v452
  %v587 = vpop.permute.xlu0 %586
  %590 = vset.pattern.permute.xlu0 0
  %591 = vperm.xlu0 %590, %v453
  %v592 = vpop.permute.xlu0 %591
  %595 = vset.pattern.permute.xlu0 0
  %596 = vperm.xlu0 %595, %v454
  %v597 = vpop.permute.xlu0 %596
  %600 = vset.pattern.permute.xlu0 0
  %601 = vperm.xlu0 %600, %v455
  %v602 = vpop.permute.xlu0 %601
  %605 = vset.pattern.permute.xlu0 0
  %606 = vperm.xlu0 %605, %v456
  %v607 = vpop.permute.xlu0 %606
  %610 = vset.pattern.permute.xlu0 0
  %611 = vperm.xlu0 %610, %v457
  %v612 = vpop.permute.xlu0 %611
  %615 = vset.pattern.permute.xlu0 0
  %616 = vperm.xlu0 %615, %v458
  %v617 = vpop.permute.xlu0 %616
  %v619 = vsub.f32 %v269, %v462
  %v620 = vsub.f32 %v271, %v462
  %v621 = vsub.f32 %v273, %v467
  %v622 = vsub.f32 %v275, %v467
  %v623 = vsub.f32 %v279, %v472
  %v624 = vsub.f32 %v281, %v472
  %v625 = vsub.f32 %v283, %v477
  %v626 = vsub.f32 %v285, %v477
  %v627 = vsub.f32 %v289, %v482
  %v628 = vsub.f32 %v291, %v482
  %v629 = vsub.f32 %v293, %v487
  %v630 = vsub.f32 %v295, %v487
  %v631 = vsub.f32 %v299, %v492
  %v632 = vsub.f32 %v301, %v492
  %v633 = vsub.f32 %v303, %v497
  %v634 = vsub.f32 %v305, %v497
  %v635 = vsub.f32 %v309, %v502
  %v636 = vsub.f32 %v311, %v502
  %v637 = vsub.f32 %v313, %v507
  %v638 = vsub.f32 %v315, %v507
  %v639 = vsub.f32 %v319, %v512
  %v640 = vsub.f32 %v321, %v512
  %v641 = vsub.f32 %v323, %v517
  %v642 = vsub.f32 %v325, %v517
  %v643 = vsub.f32 %v329, %v522
  %v644 = vsub.f32 %v331, %v522
  %v645 = vsub.f32 %v333, %v527
  %v646 = vsub.f32 %v335, %v527
  %v647 = vsub.f32 %v339, %v532
  %v648 = vsub.f32 %v341, %v532
  %v649 = vsub.f32 %v343, %v537
  %v650 = vsub.f32 %v345, %v537
  %v651 = vsub.f32 %v349, %v542
  %v652 = vsub.f32 %v351, %v542
  %v653 = vsub.f32 %v353, %v547
  %v654 = vsub.f32 %v355, %v547
  %v655 = vsub.f32 %v359, %v552
  %v656 = vsub.f32 %v361, %v552
  %v657 = vsub.f32 %v363, %v557
  %v658 = vsub.f32 %v365, %v557
  %v659 = vsub.f32 %v369, %v562
  %v660 = vsub.f32 %v371, %v562
  %v661 = vsub.f32 %v373, %v567
  %v662 = vsub.f32 %v375, %v567
  %v663 = vsub.f32 %v379, %v572
  %v664 = vsub.f32 %v381, %v572
  %v665 = vsub.f32 %v383, %v577
  %v666 = vsub.f32 %v385, %v577
  %v667 = vsub.f32 %v389, %v582
  %v668 = vsub.f32 %v391, %v582
  %v669 = vsub.f32 %v393, %v587
  %v670 = vsub.f32 %v395, %v587
  %v671 = vsub.f32 %v399, %v592
  %v672 = vsub.f32 %v401, %v592
  %v673 = vsub.f32 %v403, %v597
  %v674 = vsub.f32 %v405, %v597
  %v675 = vsub.f32 %v409, %v602
  %v676 = vsub.f32 %v411, %v602
  %v677 = vsub.f32 %v413, %v607
  %v678 = vsub.f32 %v415, %v607
  %v679 = vsub.f32 %v419, %v612
  %v680 = vsub.f32 %v421, %v612
  %v681 = vsub.f32 %v423, %v617
  %v682 = vsub.f32 %v425, %v617
  %v683 = vld [vmem:[%s3] sm:$0xff]
  %v684 = vld [vmem:[%s3 + $0x8] sm:$0xff]
  %v685 = vld [vmem:[%s3 + $0x10] sm:$0xff]
  %v686 = vld [vmem:[%s3 + $0x18] sm:$0xff]
  %v687 = vld [vmem:[%s3 + $0x20] sm:$0xff]
  %v688 = vld [vmem:[%s3 + $0x28] sm:$0xff]
  %v689 = vld [vmem:[%s3 + $0x30] sm:$0xff]
  %v690 = vld [vmem:[%s3 + $0x38] sm:$0xff]
  %v691 = vld [vmem:[%s3 + $0x40] sm:$0xff]
  %v692 = vld [vmem:[%s3 + $0x48] sm:$0xff]
  %v693 = vld [vmem:[%s3 + $0x50] sm:$0xff]
  %v694 = vld [vmem:[%s3 + $0x58] sm:$0xff]
  %v695 = vld [vmem:[%s3 + $0x60] sm:$0xff]
  %v696 = vld [vmem:[%s3 + $0x68] sm:$0xff]
  %v697 = vld [vmem:[%s3 + $0x70] sm:$0xff]
  %v698 = vld [vmem:[%s3 + $0x78] sm:$0xff]
  %v699 = vld [vmem:[%s3 + $0x80] sm:$0xff]
  %v700 = vld [vmem:[%s3 + $0x88] sm:$0xff]
  %v701 = vld [vmem:[%s3 + $0x90] sm:$0xff]
  %v702 = vld [vmem:[%s3 + $0x98] sm:$0xff]
  %v703 = vld [vmem:[%s3 + $0xa0] sm:$0xff]
  %v704 = vld [vmem:[%s3 + $0xa8] sm:$0xff]
  %v705 = vld [vmem:[%s3 + $0xb0] sm:$0xff]
  %v706 = vld [vmem:[%s3 + $0xb8] sm:$0xff]
  %v707 = vld [vmem:[%s3 + $0xc0] sm:$0xff]
  %v708 = vld [vmem:[%s3 + $0xc8] sm:$0xff]
  %v709 = vld [vmem:[%s3 + $0xd0] sm:$0xff]
  %v710 = vld [vmem:[%s3 + $0xd8] sm:$0xff]
  %v711 = vld [vmem:[%s3 + $0xe0] sm:$0xff]
  %v712 = vld [vmem:[%s3 + $0xe8] sm:$0xff]
  %v713 = vld [vmem:[%s3 + $0xf0] sm:$0xff]
  %v714 = vld [vmem:[%s3 + $0xf8] sm:$0xff]
  %v715 = vld [vmem:[%s5] sm:$0x3]
  %716 = vset.pattern.permute.xlu0 0
  %717 = vperm.xlu0 %716, %v683
  %v718 = vpop.permute.xlu0 %717
  %719 = vset.pattern.permute.xlu0 0
  %720 = vperm.xlu0 %719, %v684
  %v721 = vpop.permute.xlu0 %720
  %722 = vset.pattern.permute.xlu0 0
  %723 = vperm.xlu0 %722, %v685
  %v724 = vpop.permute.xlu0 %723
  %725 = vset.pattern.permute.xlu0 0
  %726 = vperm.xlu0 %725, %v686
  %v727 = vpop.permute.xlu0 %726
  %728 = vset.pattern.permute.xlu0 0
  %729 = vperm.xlu0 %728, %v687
  %v730 = vpop.permute.xlu0 %729
  %731 = vset.pattern.permute.xlu0 0
  %732 = vperm.xlu0 %731, %v688
  %v733 = vpop.permute.xlu0 %732
  %734 = vset.pattern.permute.xlu0 0
  %735 = vperm.xlu0 %734, %v689
  %v736 = vpop.permute.xlu0 %735
  %737 = vset.pattern.permute.xlu0 0
  %738 = vperm.xlu0 %737, %v690
  %v739 = vpop.permute.xlu0 %738
  %740 = vset.pattern.permute.xlu0 0
  %741 = vperm.xlu0 %740, %v691
  %v742 = vpop.permute.xlu0 %741
  %743 = vset.pattern.permute.xlu0 0
  %744 = vperm.xlu0 %743, %v692
  %v745 = vpop.permute.xlu0 %744
  %746 = vset.pattern.permute.xlu0 0
  %747 = vperm.xlu0 %746, %v693
  %v748 = vpop.permute.xlu0 %747
  %749 = vset.pattern.permute.xlu0 0
  %750 = vperm.xlu0 %749, %v694
  %v751 = vpop.permute.xlu0 %750
  %752 = vset.pattern.permute.xlu0 0
  %753 = vperm.xlu0 %752, %v695
  %v754 = vpop.permute.xlu0 %753
  %755 = vset.pattern.permute.xlu0 0
  %756 = vperm.xlu0 %755, %v696
  %v757 = vpop.permute.xlu0 %756
  %758 = vset.pattern.permute.xlu0 0
  %759 = vperm.xlu0 %758, %v697
  %v760 = vpop.permute.xlu0 %759
  %761 = vset.pattern.permute.xlu0 0
  %762 = vperm.xlu0 %761, %v698
  %v763 = vpop.permute.xlu0 %762
  %764 = vset.pattern.permute.xlu0 0
  %765 = vperm.xlu0 %764, %v699
  %v766 = vpop.permute.xlu0 %765
  %767 = vset.pattern.permute.xlu0 0
  %768 = vperm.xlu0 %767, %v700
  %v769 = vpop.permute.xlu0 %768
  %770 = vset.pattern.permute.xlu0 0
  %771 = vperm.xlu0 %770, %v701
  %v772 = vpop.permute.xlu0 %771
  %773 = vset.pattern.permute.xlu0 0
  %774 = vperm.xlu0 %773, %v702
  %v775 = vpop.permute.xlu0 %774
  %776 = vset.pattern.permute.xlu0 0
  %777 = vperm.xlu0 %776, %v703
  %v778 = vpop.permute.xlu0 %777
  %779 = vset.pattern.permute.xlu0 0
  %780 = vperm.xlu0 %779, %v704
  %v781 = vpop.permute.xlu0 %780
  %782 = vset.pattern.permute.xlu0 0
  %783 = vperm.xlu0 %782, %v705
  %v784 = vpop.permute.xlu0 %783
  %785 = vset.pattern.permute.xlu0 0
  %786 = vperm.xlu0 %785, %v706
  %v787 = vpop.permute.xlu0 %786
  %788 = vset.pattern.permute.xlu0 0
  %789 = vperm.xlu0 %788, %v707
  %v790 = vpop.permute.xlu0 %789
  %791 = vset.pattern.permute.xlu0 0
  %792 = vperm.xlu0 %791, %v708
  %v793 = vpop.permute.xlu0 %792
  %794 = vset.pattern.permute.xlu0 0
  %795 = vperm.xlu0 %794, %v709
  %v796 = vpop.permute.xlu0 %795
  %797 = vset.pattern.permute.xlu0 0
  %798 = vperm.xlu0 %797, %v710
  %v799 = vpop.permute.xlu0 %798
  %800 = vset.pattern.permute.xlu0 0
  %801 = vperm.xlu0 %800, %v711
  %v802 = vpop.permute.xlu0 %801
  %803 = vset.pattern.permute.xlu0 0
  %804 = vperm.xlu0 %803, %v712
  %v805 = vpop.permute.xlu0 %804
  %806 = vset.pattern.permute.xlu0 0
  %807 = vperm.xlu0 %806, %v713
  %v808 = vpop.permute.xlu0 %807
  %809 = vset.pattern.permute.xlu0 0
  %810 = vperm.xlu0 %809, %v714
  %v811 = vpop.permute.xlu0 %810
  %v812 = vlaneseq
  %v813 = vshrl.u32 %v812, 7
  %v814 = vsub.s32 0, %v813
  %v815 = vrot.slane %v715, %v814
  %v816 = vlaneseq
  %v817 = vshrl.u32 %v816, 7
  %v818 = vsub.s32 1, %v817
  %v819 = vrot.slane %v715, %v818
  %vm820 = vcmp.eq.s32.totalorder %v718, %v815
  %vm821 = vcmp.eq.s32.totalorder %v718, %v819
  %vm822 = vcmp.eq.s32.totalorder %v721, %v815
  %vm823 = vcmp.eq.s32.totalorder %v721, %v819
  %vm824 = vcmp.eq.s32.totalorder %v724, %v815
  %vm825 = vcmp.eq.s32.totalorder %v724, %v819
  %vm826 = vcmp.eq.s32.totalorder %v727, %v815
  %vm827 = vcmp.eq.s32.totalorder %v727, %v819
  %vm828 = vcmp.eq.s32.totalorder %v730, %v815
  %vm829 = vcmp.eq.s32.totalorder %v730, %v819
  %vm830 = vcmp.eq.s32.totalorder %v733, %v815
  %vm831 = vcmp.eq.s32.totalorder %v733, %v819
  %vm832 = vcmp.eq.s32.totalorder %v736, %v815
  %vm833 = vcmp.eq.s32.totalorder %v736, %v819
  %vm834 = vcmp.eq.s32.totalorder %v739, %v815
  %vm835 = vcmp.eq.s32.totalorder %v739, %v819
  %vm836 = vcmp.eq.s32.totalorder %v742, %v815
  %vm837 = vcmp.eq.s32.totalorder %v742, %v819
  %vm838 = vcmp.eq.s32.totalorder %v745, %v815
  %vm839 = vcmp.eq.s32.totalorder %v745, %v819
  %vm840 = vcmp.eq.s32.totalorder %v748, %v815
  %vm841 = vcmp.eq.s32.totalorder %v748, %v819
  %vm842 = vcmp.eq.s32.totalorder %v751, %v815
  %vm843 = vcmp.eq.s32.totalorder %v751, %v819
  %vm844 = vcmp.eq.s32.totalorder %v754, %v815
  %vm845 = vcmp.eq.s32.totalorder %v754, %v819
  %vm846 = vcmp.eq.s32.totalorder %v757, %v815
  %vm847 = vcmp.eq.s32.totalorder %v757, %v819
  %vm848 = vcmp.eq.s32.totalorder %v760, %v815
  %vm849 = vcmp.eq.s32.totalorder %v760, %v819
  %vm850 = vcmp.eq.s32.totalorder %v763, %v815
  %vm851 = vcmp.eq.s32.totalorder %v763, %v819
  %vm852 = vcmp.eq.s32.totalorder %v766, %v815
  %vm853 = vcmp.eq.s32.totalorder %v766, %v819
  %vm854 = vcmp.eq.s32.totalorder %v769, %v815
  %vm855 = vcmp.eq.s32.totalorder %v769, %v819
  %vm856 = vcmp.eq.s32.totalorder %v772, %v815
  %vm857 = vcmp.eq.s32.totalorder %v772, %v819
  %vm858 = vcmp.eq.s32.totalorder %v775, %v815
  %vm859 = vcmp.eq.s32.totalorder %v775, %v819
  %vm860 = vcmp.eq.s32.totalorder %v778, %v815
  %vm861 = vcmp.eq.s32.totalorder %v778, %v819
  %vm862 = vcmp.eq.s32.totalorder %v781, %v815
  %vm863 = vcmp.eq.s32.totalorder %v781, %v819
  %vm864 = vcmp.eq.s32.totalorder %v784, %v815
  %vm865 = vcmp.eq.s32.totalorder %v784, %v819
  %vm866 = vcmp.eq.s32.totalorder %v787, %v815
  %vm867 = vcmp.eq.s32.totalorder %v787, %v819
  %vm868 = vcmp.eq.s32.totalorder %v790, %v815
  %vm869 = vcmp.eq.s32.totalorder %v790, %v819
  %vm870 = vcmp.eq.s32.totalorder %v793, %v815
  %vm871 = vcmp.eq.s32.totalorder %v793, %v819
  %vm872 = vcmp.eq.s32.totalorder %v796, %v815
  %vm873 = vcmp.eq.s32.totalorder %v796, %v819
  %vm874 = vcmp.eq.s32.totalorder %v799, %v815
  %vm875 = vcmp.eq.s32.totalorder %v799, %v819
  %vm876 = vcmp.eq.s32.totalorder %v802, %v815
  %vm877 = vcmp.eq.s32.totalorder %v802, %v819
  %vm878 = vcmp.eq.s32.totalorder %v805, %v815
  %vm879 = vcmp.eq.s32.totalorder %v805, %v819
  %vm880 = vcmp.eq.s32.totalorder %v808, %v815
  %vm881 = vcmp.eq.s32.totalorder %v808, %v819
  %vm882 = vcmp.eq.s32.totalorder %v811, %v815
  %vm883 = vcmp.eq.s32.totalorder %v811, %v819
  %vm884 = vcmp.lt.f32.partialorder %v619, 0.4
  %vm885 = vcmp.lt.f32.partialorder %v620, 0.4
  %vm886 = vcmp.lt.f32.partialorder %v621, 0.4
  %vm887 = vcmp.lt.f32.partialorder %v622, 0.4
  %vm888 = vcmp.lt.f32.partialorder %v623, 0.4
  %vm889 = vcmp.lt.f32.partialorder %v624, 0.4
  %vm890 = vcmp.lt.f32.partialorder %v625, 0.4
  %vm891 = vcmp.lt.f32.partialorder %v626, 0.4
  %vm892 = vcmp.lt.f32.partialorder %v627, 0.4
  %vm893 = vcmp.lt.f32.partialorder %v628, 0.4
  %vm894 = vcmp.lt.f32.partialorder %v629, 0.4
  %vm895 = vcmp.lt.f32.partialorder %v630, 0.4
  %vm896 = vcmp.lt.f32.partialorder %v631, 0.4
  %vm897 = vcmp.lt.f32.partialorder %v632, 0.4
  %vm898 = vcmp.lt.f32.partialorder %v633, 0.4
  %vm899 = vcmp.lt.f32.partialorder %v634, 0.4
  %vm900 = vcmp.lt.f32.partialorder %v635, 0.4
  %vm901 = vcmp.lt.f32.partialorder %v636, 0.4
  %vm902 = vcmp.lt.f32.partialorder %v637, 0.4
  %vm903 = vcmp.lt.f32.partialorder %v638, 0.4
  %vm904 = vcmp.lt.f32.partialorder %v639, 0.4
  %vm905 = vcmp.lt.f32.partialorder %v640, 0.4
  %vm906 = vcmp.lt.f32.partialorder %v641, 0.4
  %vm907 = vcmp.lt.f32.partialorder %v642, 0.4
  %vm908 = vcmp.lt.f32.partialorder %v643, 0.4
  %vm909 = vcmp.lt.f32.partialorder %v644, 0.4
  %vm910 = vcmp.lt.f32.partialorder %v645, 0.4
  %vm911 = vcmp.lt.f32.partialorder %v646, 0.4
  %vm912 = vcmp.lt.f32.partialorder %v647, 0.4
  %vm913 = vcmp.lt.f32.partialorder %v648, 0.4
  %vm914 = vcmp.lt.f32.partialorder %v649, 0.4
  %vm915 = vcmp.lt.f32.partialorder %v650, 0.4
  %vm916 = vcmp.lt.f32.partialorder %v651, 0.4
  %vm917 = vcmp.lt.f32.partialorder %v652, 0.4
  %vm918 = vcmp.lt.f32.partialorder %v653, 0.4
  %vm919 = vcmp.lt.f32.partialorder %v654, 0.4
  %vm920 = vcmp.lt.f32.partialorder %v655, 0.4
  %vm921 = vcmp.lt.f32.partialorder %v656, 0.4
  %vm922 = vcmp.lt.f32.partialorder %v657, 0.4
  %vm923 = vcmp.lt.f32.partialorder %v658, 0.4
  %vm924 = vcmp.lt.f32.partialorder %v659, 0.4
  %vm925 = vcmp.lt.f32.partialorder %v660, 0.4
  %vm926 = vcmp.lt.f32.partialorder %v661, 0.4
  %vm927 = vcmp.lt.f32.partialorder %v662, 0.4
  %vm928 = vcmp.lt.f32.partialorder %v663, 0.4
  %vm929 = vcmp.lt.f32.partialorder %v664, 0.4
  %vm930 = vcmp.lt.f32.partialorder %v665, 0.4
  %vm931 = vcmp.lt.f32.partialorder %v666, 0.4
  %vm932 = vcmp.lt.f32.partialorder %v667, 0.4
  %vm933 = vcmp.lt.f32.partialorder %v668, 0.4
  %vm934 = vcmp.lt.f32.partialorder %v669, 0.4
  %vm935 = vcmp.lt.f32.partialorder %v670, 0.4
  %vm936 = vcmp.lt.f32.partialorder %v671, 0.4
  %vm937 = vcmp.lt.f32.partialorder %v672, 0.4
  %vm938 = vcmp.lt.f32.partialorder %v673, 0.4
  %vm939 = vcmp.lt.f32.partialorder %v674, 0.4
  %vm940 = vcmp.lt.f32.partialorder %v675, 0.4
  %vm941 = vcmp.lt.f32.partialorder %v676, 0.4
  %vm942 = vcmp.lt.f32.partialorder %v677, 0.4
  %vm943 = vcmp.lt.f32.partialorder %v678, 0.4
  %vm944 = vcmp.lt.f32.partialorder %v679, 0.4
  %vm945 = vcmp.lt.f32.partialorder %v680, 0.4
  %vm946 = vcmp.lt.f32.partialorder %v681, 0.4
  %vm947 = vcmp.lt.f32.partialorder %v682, 0.4
  %vm948 = vmand %vm820, %vm884
  %vm949 = vmand %vm821, %vm885
  %vm950 = vmand %vm822, %vm886
  %vm951 = vmand %vm823, %vm887
  %vm952 = vmand %vm824, %vm888
  %vm953 = vmand %vm825, %vm889
  %vm954 = vmand %vm826, %vm890
  %vm955 = vmand %vm827, %vm891
  %vm956 = vmand %vm828, %vm892
  %vm957 = vmand %vm829, %vm893
  %vm958 = vmand %vm830, %vm894
  %vm959 = vmand %vm831, %vm895
  %vm960 = vmand %vm832, %vm896
  %vm961 = vmand %vm833, %vm897
  %vm962 = vmand %vm834, %vm898
  %vm963 = vmand %vm835, %vm899
  %vm964 = vmand %vm836, %vm900
  %vm965 = vmand %vm837, %vm901
  %vm966 = vmand %vm838, %vm902
  %vm967 = vmand %vm839, %vm903
  %vm968 = vmand %vm840, %vm904
  %vm969 = vmand %vm841, %vm905
  %vm970 = vmand %vm842, %vm906
  %vm971 = vmand %vm843, %vm907
  %vm972 = vmand %vm844, %vm908
  %vm973 = vmand %vm845, %vm909
  %vm974 = vmand %vm846, %vm910
  %vm975 = vmand %vm847, %vm911
  %vm976 = vmand %vm848, %vm912
  %vm977 = vmand %vm849, %vm913
  %vm978 = vmand %vm850, %vm914
  %vm979 = vmand %vm851, %vm915
  %vm980 = vmand %vm852, %vm916
  %vm981 = vmand %vm853, %vm917
  %vm982 = vmand %vm854, %vm918
  %vm983 = vmand %vm855, %vm919
  %vm984 = vmand %vm856, %vm920
  %vm985 = vmand %vm857, %vm921
  %vm986 = vmand %vm858, %vm922
  %vm987 = vmand %vm859, %vm923
  %vm988 = vmand %vm860, %vm924
  %vm989 = vmand %vm861, %vm925
  %vm990 = vmand %vm862, %vm926
  %vm991 = vmand %vm863, %vm927
  %vm992 = vmand %vm864, %vm928
  %vm993 = vmand %vm865, %vm929
  %vm994 = vmand %vm866, %vm930
  %vm995 = vmand %vm867, %vm931
  %vm996 = vmand %vm868, %vm932
  %vm997 = vmand %vm869, %vm933
  %vm998 = vmand %vm870, %vm934
  %vm999 = vmand %vm871, %vm935
  %vm1000 = vmand %vm872, %vm936
  %vm1001 = vmand %vm873, %vm937
  %vm1002 = vmand %vm874, %vm938
  %vm1003 = vmand %vm875, %vm939
  %vm1004 = vmand %vm876, %vm940
  %vm1005 = vmand %vm877, %vm941
  %vm1006 = vmand %vm878, %vm942
  %vm1007 = vmand %vm879, %vm943
  %vm1008 = vmand %vm880, %vm944
  %vm1009 = vmand %vm881, %vm945
  %vm1010 = vmand %vm882, %vm946
  %vm1011 = vmand %vm883, %vm947
  %v1012 = vsub.f32 0.4, %v619
  %v1013 = vsub.f32 0.4, %v620
  %v1014 = vsub.f32 0.4, %v621
  %v1015 = vsub.f32 0.4, %v622
  %v1016 = vsub.f32 0.4, %v623
  %v1017 = vsub.f32 0.4, %v624
  %v1018 = vsub.f32 0.4, %v625
  %v1019 = vsub.f32 0.4, %v626
  %v1020 = vsub.f32 0.4, %v627
  %v1021 = vsub.f32 0.4, %v628
  %v1022 = vsub.f32 0.4, %v629
  %v1023 = vsub.f32 0.4, %v630
  %v1024 = vsub.f32 0.4, %v631
  %v1025 = vsub.f32 0.4, %v632
  %v1026 = vsub.f32 0.4, %v633
  %v1027 = vsub.f32 0.4, %v634
  %v1028 = vsub.f32 0.4, %v635
  %v1029 = vsub.f32 0.4, %v636
  %v1030 = vsub.f32 0.4, %v637
  %v1031 = vsub.f32 0.4, %v638
  %v1032 = vsub.f32 0.4, %v639
  %v1033 = vsub.f32 0.4, %v640
  %v1034 = vsub.f32 0.4, %v641
  %v1035 = vsub.f32 0.4, %v642
  %v1036 = vsub.f32 0.4, %v643
  %v1037 = vsub.f32 0.4, %v644
  %v1038 = vsub.f32 0.4, %v645
  %v1039 = vsub.f32 0.4, %v646
  %v1040 = vsub.f32 0.4, %v647
  %v1041 = vsub.f32 0.4, %v648
  %v1042 = vsub.f32 0.4, %v649
  %v1043 = vsub.f32 0.4, %v650
  %v1044 = vsub.f32 0.4, %v651
  %v1045 = vsub.f32 0.4, %v652
  %v1046 = vsub.f32 0.4, %v653
  %v1047 = vsub.f32 0.4, %v654
  %v1048 = vsub.f32 0.4, %v655
  %v1049 = vsub.f32 0.4, %v656
  %v1050 = vsub.f32 0.4, %v657
  %v1051 = vsub.f32 0.4, %v658
  %v1052 = vsub.f32 0.4, %v659
  %v1053 = vsub.f32 0.4, %v660
  %v1054 = vsub.f32 0.4, %v661
  %v1055 = vsub.f32 0.4, %v662
  %v1056 = vsub.f32 0.4, %v663
  %v1057 = vsub.f32 0.4, %v664
  %v1058 = vsub.f32 0.4, %v665
  %v1059 = vsub.f32 0.4, %v666
  %v1060 = vsub.f32 0.4, %v667
  %v1061 = vsub.f32 0.4, %v668
  %v1062 = vsub.f32 0.4, %v669
  %v1063 = vsub.f32 0.4, %v670
  %v1064 = vsub.f32 0.4, %v671
  %v1065 = vsub.f32 0.4, %v672
  %v1066 = vsub.f32 0.4, %v673
  %v1067 = vsub.f32 0.4, %v674
  %v1068 = vsub.f32 0.4, %v675
  %v1069 = vsub.f32 0.4, %v676
  %v1070 = vsub.f32 0.4, %v677
  %v1071 = vsub.f32 0.4, %v678
  %v1072 = vsub.f32 0.4, %v679
  %v1073 = vsub.f32 0.4, %v680
  %v1074 = vsub.f32 0.4, %v681
  %v1075 = vsub.f32 0.4, %v682
  %v1076 = vsel %vm948, %v1012, 0.0
  %v1077 = vsel %vm949, %v1013, 0.0
  %v1078 = vsel %vm950, %v1014, 0.0
  %v1079 = vsel %vm951, %v1015, 0.0
  %v1080 = vsel %vm952, %v1016, 0.0
  %v1081 = vsel %vm953, %v1017, 0.0
  %v1082 = vsel %vm954, %v1018, 0.0
  %v1083 = vsel %vm955, %v1019, 0.0
  %v1084 = vsel %vm956, %v1020, 0.0
  %v1085 = vsel %vm957, %v1021, 0.0
  %v1086 = vsel %vm958, %v1022, 0.0
  %v1087 = vsel %vm959, %v1023, 0.0
  %v1088 = vsel %vm960, %v1024, 0.0
  %v1089 = vsel %vm961, %v1025, 0.0
  %v1090 = vsel %vm962, %v1026, 0.0
  %v1091 = vsel %vm963, %v1027, 0.0
  %v1092 = vsel %vm964, %v1028, 0.0
  %v1093 = vsel %vm965, %v1029, 0.0
  %v1094 = vsel %vm966, %v1030, 0.0
  %v1095 = vsel %vm967, %v1031, 0.0
  %v1096 = vsel %vm968, %v1032, 0.0
  %v1097 = vsel %vm969, %v1033, 0.0
  %v1098 = vsel %vm970, %v1034, 0.0
  %v1099 = vsel %vm971, %v1035, 0.0
  %v1100 = vsel %vm972, %v1036, 0.0
  %v1101 = vsel %vm973, %v1037, 0.0
  %v1102 = vsel %vm974, %v1038, 0.0
  %v1103 = vsel %vm975, %v1039, 0.0
  %v1104 = vsel %vm976, %v1040, 0.0
  %v1105 = vsel %vm977, %v1041, 0.0
  %v1106 = vsel %vm978, %v1042, 0.0
  %v1107 = vsel %vm979, %v1043, 0.0
  %v1108 = vsel %vm980, %v1044, 0.0
  %v1109 = vsel %vm981, %v1045, 0.0
  %v1110 = vsel %vm982, %v1046, 0.0
  %v1111 = vsel %vm983, %v1047, 0.0
  %v1112 = vsel %vm984, %v1048, 0.0
  %v1113 = vsel %vm985, %v1049, 0.0
  %v1114 = vsel %vm986, %v1050, 0.0
  %v1115 = vsel %vm987, %v1051, 0.0
  %v1116 = vsel %vm988, %v1052, 0.0
  %v1117 = vsel %vm989, %v1053, 0.0
  %v1118 = vsel %vm990, %v1054, 0.0
  %v1119 = vsel %vm991, %v1055, 0.0
  %v1120 = vsel %vm992, %v1056, 0.0
  %v1121 = vsel %vm993, %v1057, 0.0
  %v1122 = vsel %vm994, %v1058, 0.0
  %v1123 = vsel %vm995, %v1059, 0.0
  %v1124 = vsel %vm996, %v1060, 0.0
  %v1125 = vsel %vm997, %v1061, 0.0
  %v1126 = vsel %vm998, %v1062, 0.0
  %v1127 = vsel %vm999, %v1063, 0.0
  %v1128 = vsel %vm1000, %v1064, 0.0
  %v1129 = vsel %vm1001, %v1065, 0.0
  %v1130 = vsel %vm1002, %v1066, 0.0
  %v1131 = vsel %vm1003, %v1067, 0.0
  %v1132 = vsel %vm1004, %v1068, 0.0
  %v1133 = vsel %vm1005, %v1069, 0.0
  %v1134 = vsel %vm1006, %v1070, 0.0
  %v1135 = vsel %vm1007, %v1071, 0.0
  %v1136 = vsel %vm1008, %v1072, 0.0
  %v1137 = vsel %vm1009, %v1073, 0.0
  %v1138 = vsel %vm1010, %v1074, 0.0
  %v1139 = vsel %vm1011, %v1075, 0.0
  %vm1140 = vmxor %vm820, 1
  %vm1141 = vmxor %vm821, 1
  %vm1142 = vmxor %vm822, 1
  %vm1143 = vmxor %vm823, 1
  %vm1144 = vmxor %vm824, 1
  %vm1145 = vmxor %vm825, 1
  %vm1146 = vmxor %vm826, 1
  %vm1147 = vmxor %vm827, 1
  %vm1148 = vmxor %vm828, 1
  %vm1149 = vmxor %vm829, 1
  %vm1150 = vmxor %vm830, 1
  %vm1151 = vmxor %vm831, 1
  %vm1152 = vmxor %vm832, 1
  %vm1153 = vmxor %vm833, 1
  %vm1154 = vmxor %vm834, 1
  %vm1155 = vmxor %vm835, 1
  %vm1156 = vmxor %vm836, 1
  %vm1157 = vmxor %vm837, 1
  %vm1158 = vmxor %vm838, 1
  %vm1159 = vmxor %vm839, 1
  %vm1160 = vmxor %vm840, 1
  %vm1161 = vmxor %vm841, 1
  %vm1162 = vmxor %vm842, 1
  %vm1163 = vmxor %vm843, 1
  %vm1164 = vmxor %vm844, 1
  %vm1165 = vmxor %vm845, 1
  %vm1166 = vmxor %vm846, 1
  %vm1167 = vmxor %vm847, 1
  %vm1168 = vmxor %vm848, 1
  %vm1169 = vmxor %vm849, 1
  %vm1170 = vmxor %vm850, 1
  %vm1171 = vmxor %vm851, 1
  %vm1172 = vmxor %vm852, 1
  %vm1173 = vmxor %vm853, 1
  %vm1174 = vmxor %vm854, 1
  %vm1175 = vmxor %vm855, 1
  %vm1176 = vmxor %vm856, 1
  %vm1177 = vmxor %vm857, 1
  %vm1178 = vmxor %vm858, 1
  %vm1179 = vmxor %vm859, 1
  %vm1180 = vmxor %vm860, 1
  %vm1181 = vmxor %vm861, 1
  %vm1182 = vmxor %vm862, 1
  %vm1183 = vmxor %vm863, 1
  %vm1184 = vmxor %vm864, 1
  %vm1185 = vmxor %vm865, 1
  %vm1186 = vmxor %vm866, 1
  %vm1187 = vmxor %vm867, 1
  %vm1188 = vmxor %vm868, 1
  %vm1189 = vmxor %vm869, 1
  %vm1190 = vmxor %vm870, 1
  %vm1191 = vmxor %vm871, 1
  %vm1192 = vmxor %vm872, 1
  %vm1193 = vmxor %vm873, 1
  %vm1194 = vmxor %vm874, 1
  %vm1195 = vmxor %vm875, 1
  %vm1196 = vmxor %vm876, 1
  %vm1197 = vmxor %vm877, 1
  %vm1198 = vmxor %vm878, 1
  %vm1199 = vmxor %vm879, 1
  %vm1200 = vmxor %vm880, 1
  %vm1201 = vmxor %vm881, 1
  %vm1202 = vmxor %vm882, 1
  %vm1203 = vmxor %vm883, 1
  %vm1204 = vcmp.gt.f32.partialorder %v619, 0.0
  %vm1205 = vcmp.gt.f32.partialorder %v620, 0.0
  %vm1206 = vcmp.gt.f32.partialorder %v621, 0.0
  %vm1207 = vcmp.gt.f32.partialorder %v622, 0.0
  %vm1208 = vcmp.gt.f32.partialorder %v623, 0.0
  %vm1209 = vcmp.gt.f32.partialorder %v624, 0.0
  %vm1210 = vcmp.gt.f32.partialorder %v625, 0.0
  %vm1211 = vcmp.gt.f32.partialorder %v626, 0.0
  %vm1212 = vcmp.gt.f32.partialorder %v627, 0.0
  %vm1213 = vcmp.gt.f32.partialorder %v628, 0.0
  %vm1214 = vcmp.gt.f32.partialorder %v629, 0.0
  %vm1215 = vcmp.gt.f32.partialorder %v630, 0.0
  %vm1216 = vcmp.gt.f32.partialorder %v631, 0.0
  %vm1217 = vcmp.gt.f32.partialorder %v632, 0.0
  %vm1218 = vcmp.gt.f32.partialorder %v633, 0.0
  %vm1219 = vcmp.gt.f32.partialorder %v634, 0.0
  %vm1220 = vcmp.gt.f32.partialorder %v635, 0.0
  %vm1221 = vcmp.gt.f32.partialorder %v636, 0.0
  %vm1222 = vcmp.gt.f32.partialorder %v637, 0.0
  %vm1223 = vcmp.gt.f32.partialorder %v638, 0.0
  %vm1224 = vcmp.gt.f32.partialorder %v639, 0.0
  %vm1225 = vcmp.gt.f32.partialorder %v640, 0.0
  %vm1226 = vcmp.gt.f32.partialorder %v641, 0.0
  %vm1227 = vcmp.gt.f32.partialorder %v642, 0.0
  %vm1228 = vcmp.gt.f32.partialorder %v643, 0.0
  %vm1229 = vcmp.gt.f32.partialorder %v644, 0.0
  %vm1230 = vcmp.gt.f32.partialorder %v645, 0.0
  %vm1231 = vcmp.gt.f32.partialorder %v646, 0.0
  %vm1232 = vcmp.gt.f32.partialorder %v647, 0.0
  %vm1233 = vcmp.gt.f32.partialorder %v648, 0.0
  %vm1234 = vcmp.gt.f32.partialorder %v649, 0.0
  %vm1235 = vcmp.gt.f32.partialorder %v650, 0.0
  %vm1236 = vcmp.gt.f32.partialorder %v651, 0.0
  %vm1237 = vcmp.gt.f32.partialorder %v652, 0.0
  %vm1238 = vcmp.gt.f32.partialorder %v653, 0.0
  %vm1239 = vcmp.gt.f32.partialorder %v654, 0.0
  %vm1240 = vcmp.gt.f32.partialorder %v655, 0.0
  %vm1241 = vcmp.gt.f32.partialorder %v656, 0.0
  %vm1242 = vcmp.gt.f32.partialorder %v657, 0.0
  %vm1243 = vcmp.gt.f32.partialorder %v658, 0.0
  %vm1244 = vcmp.gt.f32.partialorder %v659, 0.0
  %vm1245 = vcmp.gt.f32.partialorder %v660, 0.0
  %vm1246 = vcmp.gt.f32.partialorder %v661, 0.0
  %vm1247 = vcmp.gt.f32.partialorder %v662, 0.0
  %vm1248 = vcmp.gt.f32.partialorder %v663, 0.0
  %vm1249 = vcmp.gt.f32.partialorder %v664, 0.0
  %vm1250 = vcmp.gt.f32.partialorder %v665, 0.0
  %vm1251 = vcmp.gt.f32.partialorder %v666, 0.0
  %vm1252 = vcmp.gt.f32.partialorder %v667, 0.0
  %vm1253 = vcmp.gt.f32.partialorder %v668, 0.0
  %vm1254 = vcmp.gt.f32.partialorder %v669, 0.0
  %vm1255 = vcmp.gt.f32.partialorder %v670, 0.0
  %vm1256 = vcmp.gt.f32.partialorder %v671, 0.0
  %vm1257 = vcmp.gt.f32.partialorder %v672, 0.0
  %vm1258 = vcmp.gt.f32.partialorder %v673, 0.0
  %vm1259 = vcmp.gt.f32.partialorder %v674, 0.0
  %vm1260 = vcmp.gt.f32.partialorder %v675, 0.0
  %vm1261 = vcmp.gt.f32.partialorder %v676, 0.0
  %vm1262 = vcmp.gt.f32.partialorder %v677, 0.0
  %vm1263 = vcmp.gt.f32.partialorder %v678, 0.0
  %vm1264 = vcmp.gt.f32.partialorder %v679, 0.0
  %vm1265 = vcmp.gt.f32.partialorder %v680, 0.0
  %vm1266 = vcmp.gt.f32.partialorder %v681, 0.0
  %vm1267 = vcmp.gt.f32.partialorder %v682, 0.0
  %vm1268 = vmand %vm1140, %vm1204
  %vm1269 = vmand %vm1141, %vm1205
  %vm1270 = vmand %vm1142, %vm1206
  %vm1271 = vmand %vm1143, %vm1207
  %vm1272 = vmand %vm1144, %vm1208
  %vm1273 = vmand %vm1145, %vm1209
  %vm1274 = vmand %vm1146, %vm1210
  %vm1275 = vmand %vm1147, %vm1211
  %vm1276 = vmand %vm1148, %vm1212
  %vm1277 = vmand %vm1149, %vm1213
  %vm1278 = vmand %vm1150, %vm1214
  %vm1279 = vmand %vm1151, %vm1215
  %vm1280 = vmand %vm1152, %vm1216
  %vm1281 = vmand %vm1153, %vm1217
  %vm1282 = vmand %vm1154, %vm1218
  %vm1283 = vmand %vm1155, %vm1219
  %vm1284 = vmand %vm1156, %vm1220
  %vm1285 = vmand %vm1157, %vm1221
  %vm1286 = vmand %vm1158, %vm1222
  %vm1287 = vmand %vm1159, %vm1223
  %vm1288 = vmand %vm1160, %vm1224
  %vm1289 = vmand %vm1161, %vm1225
  %vm1290 = vmand %vm1162, %vm1226
  %vm1291 = vmand %vm1163, %vm1227
  %vm1292 = vmand %vm1164, %vm1228
  %vm1293 = vmand %vm1165, %vm1229
  %vm1294 = vmand %vm1166, %vm1230
  %vm1295 = vmand %vm1167, %vm1231
  %vm1296 = vmand %vm1168, %vm1232
  %vm1297 = vmand %vm1169, %vm1233
  %vm1298 = vmand %vm1170, %vm1234
  %vm1299 = vmand %vm1171, %vm1235
  %vm1300 = vmand %vm1172, %vm1236
  %vm1301 = vmand %vm1173, %vm1237
  %vm1302 = vmand %vm1174, %vm1238
  %vm1303 = vmand %vm1175, %vm1239
  %vm1304 = vmand %vm1176, %vm1240
  %vm1305 = vmand %vm1177, %vm1241
  %vm1306 = vmand %vm1178, %vm1242
  %vm1307 = vmand %vm1179, %vm1243
  %vm1308 = vmand %vm1180, %vm1244
  %vm1309 = vmand %vm1181, %vm1245
  %vm1310 = vmand %vm1182, %vm1246
  %vm1311 = vmand %vm1183, %vm1247
  %vm1312 = vmand %vm1184, %vm1248
  %vm1313 = vmand %vm1185, %vm1249
  %vm1314 = vmand %vm1186, %vm1250
  %vm1315 = vmand %vm1187, %vm1251
  %vm1316 = vmand %vm1188, %vm1252
  %vm1317 = vmand %vm1189, %vm1253
  %vm1318 = vmand %vm1190, %vm1254
  %vm1319 = vmand %vm1191, %vm1255
  %vm1320 = vmand %vm1192, %vm1256
  %vm1321 = vmand %vm1193, %vm1257
  %vm1322 = vmand %vm1194, %vm1258
  %vm1323 = vmand %vm1195, %vm1259
  %vm1324 = vmand %vm1196, %vm1260
  %vm1325 = vmand %vm1197, %vm1261
  %vm1326 = vmand %vm1198, %vm1262
  %vm1327 = vmand %vm1199, %vm1263
  %vm1328 = vmand %vm1200, %vm1264
  %vm1329 = vmand %vm1201, %vm1265
  %vm1330 = vmand %vm1202, %vm1266
  %vm1331 = vmand %vm1203, %vm1267
  %v1332 = vmul.f32 %v619, 10.0
  %v1333 = vmul.f32 %v620, 10.0
  %v1334 = vmul.f32 %v621, 10.0
  %v1335 = vmul.f32 %v622, 10.0
  %v1336 = vmul.f32 %v623, 10.0
  %v1337 = vmul.f32 %v624, 10.0
  %v1338 = vmul.f32 %v625, 10.0
  %v1339 = vmul.f32 %v626, 10.0
  %v1340 = vmul.f32 %v627, 10.0
  %v1341 = vmul.f32 %v628, 10.0
  %v1342 = vmul.f32 %v629, 10.0
  %v1343 = vmul.f32 %v630, 10.0
  %v1344 = vmul.f32 %v631, 10.0
  %v1345 = vmul.f32 %v632, 10.0
  %v1346 = vmul.f32 %v633, 10.0
  %v1347 = vmul.f32 %v634, 10.0
  %v1348 = vmul.f32 %v635, 10.0
  %v1349 = vmul.f32 %v636, 10.0
  %v1350 = vmul.f32 %v637, 10.0
  %v1351 = vmul.f32 %v638, 10.0
  %v1352 = vmul.f32 %v639, 10.0
  %v1353 = vmul.f32 %v640, 10.0
  %v1354 = vmul.f32 %v641, 10.0
  %v1355 = vmul.f32 %v642, 10.0
  %v1356 = vmul.f32 %v643, 10.0
  %v1357 = vmul.f32 %v644, 10.0
  %v1358 = vmul.f32 %v645, 10.0
  %v1359 = vmul.f32 %v646, 10.0
  %v1360 = vmul.f32 %v647, 10.0
  %v1361 = vmul.f32 %v648, 10.0
  %v1362 = vmul.f32 %v649, 10.0
  %v1363 = vmul.f32 %v650, 10.0
  %v1364 = vmul.f32 %v651, 10.0
  %v1365 = vmul.f32 %v652, 10.0
  %v1366 = vmul.f32 %v653, 10.0
  %v1367 = vmul.f32 %v654, 10.0
  %v1368 = vmul.f32 %v655, 10.0
  %v1369 = vmul.f32 %v656, 10.0
  %v1370 = vmul.f32 %v657, 10.0
  %v1371 = vmul.f32 %v658, 10.0
  %v1372 = vmul.f32 %v659, 10.0
  %v1373 = vmul.f32 %v660, 10.0
  %v1374 = vmul.f32 %v661, 10.0
  %v1375 = vmul.f32 %v662, 10.0
  %v1376 = vmul.f32 %v663, 10.0
  %v1377 = vmul.f32 %v664, 10.0
  %v1378 = vmul.f32 %v665, 10.0
  %v1379 = vmul.f32 %v666, 10.0
  %v1380 = vmul.f32 %v667, 10.0
  %v1381 = vmul.f32 %v668, 10.0
  %v1382 = vmul.f32 %v669, 10.0
  %v1383 = vmul.f32 %v670, 10.0
  %v1384 = vmul.f32 %v671, 10.0
  %v1385 = vmul.f32 %v672, 10.0
  %v1386 = vmul.f32 %v673, 10.0
  %v1387 = vmul.f32 %v674, 10.0
  %v1388 = vmul.f32 %v675, 10.0
  %v1389 = vmul.f32 %v676, 10.0
  %v1390 = vmul.f32 %v677, 10.0
  %v1391 = vmul.f32 %v678, 10.0
  %v1392 = vmul.f32 %v679, 10.0
  %v1393 = vmul.f32 %v680, 10.0
  %v1394 = vmul.f32 %v681, 10.0
  %v1395 = vmul.f32 %v682, 10.0
  %v1396 = vmul.f32 %v1332, 1.442695
  %v1397 = vpow.pop %v1396
  %v1398 = vmul.f32 %v1333, 1.442695
  %v1399 = vpow.pop %v1398
  %v1400 = vmul.f32 %v1334, 1.442695
  %v1401 = vpow.pop %v1400
  %v1402 = vmul.f32 %v1335, 1.442695
  %v1403 = vpow.pop %v1402
  %v1404 = vmul.f32 %v1336, 1.442695
  %v1405 = vpow.pop %v1404
  %v1406 = vmul.f32 %v1337, 1.442695
  %v1407 = vpow.pop %v1406
  %v1408 = vmul.f32 %v1338, 1.442695
  %v1409 = vpow.pop %v1408
  %v1410 = vmul.f32 %v1339, 1.442695
  %v1411 = vpow.pop %v1410
  %v1412 = vmul.f32 %v1340, 1.442695
  %v1413 = vpow.pop %v1412
  %v1414 = vmul.f32 %v1341, 1.442695
  %v1415 = vpow.pop %v1414
  %v1416 = vmul.f32 %v1342, 1.442695
  %v1417 = vpow.pop %v1416
  %v1418 = vmul.f32 %v1343, 1.442695
  %v1419 = vpow.pop %v1418
  %v1420 = vmul.f32 %v1344, 1.442695
  %v1421 = vpow.pop %v1420
  %v1422 = vmul.f32 %v1345, 1.442695
  %v1423 = vpow.pop %v1422
  %v1424 = vmul.f32 %v1346, 1.442695
  %v1425 = vpow.pop %v1424
  %v1426 = vmul.f32 %v1347, 1.442695
  %v1427 = vpow.pop %v1426
  %v1428 = vmul.f32 %v1348, 1.442695
  %v1429 = vpow.pop %v1428
  %v1430 = vmul.f32 %v1349, 1.442695
  %v1431 = vpow.pop %v1430
  %v1432 = vmul.f32 %v1350, 1.442695
  %v1433 = vpow.pop %v1432
  %v1434 = vmul.f32 %v1351, 1.442695
  %v1435 = vpow.pop %v1434
  %v1436 = vmul.f32 %v1352, 1.442695
  %v1437 = vpow.pop %v1436
  %v1438 = vmul.f32 %v1353, 1.442695
  %v1439 = vpow.pop %v1438
  %v1440 = vmul.f32 %v1354, 1.442695
  %v1441 = vpow.pop %v1440
  %v1442 = vmul.f32 %v1355, 1.442695
  %v1443 = vpow.pop %v1442
  %v1444 = vmul.f32 %v1356, 1.442695
  %v1445 = vpow.pop %v1444
  %v1446 = vmul.f32 %v1357, 1.442695
  %v1447 = vpow.pop %v1446
  %v1448 = vmul.f32 %v1358, 1.442695
  %v1449 = vpow.pop %v1448
  %v1450 = vmul.f32 %v1359, 1.442695
  %v1451 = vpow.pop %v1450
  %v1452 = vmul.f32 %v1360, 1.442695
  %v1453 = vpow.pop %v1452
  %v1454 = vmul.f32 %v1361, 1.442695
  %v1455 = vpow.pop %v1454
  %v1456 = vmul.f32 %v1362, 1.442695
  %v1457 = vpow.pop %v1456
  %v1458 = vmul.f32 %v1363, 1.442695
  %v1459 = vpow.pop %v1458
  %v1460 = vmul.f32 %v1364, 1.442695
  %v1461 = vpow.pop %v1460
  %v1462 = vmul.f32 %v1365, 1.442695
  %v1463 = vpow.pop %v1462
  %v1464 = vmul.f32 %v1366, 1.442695
  %v1465 = vpow.pop %v1464
  %v1466 = vmul.f32 %v1367, 1.442695
  %v1467 = vpow.pop %v1466
  %v1468 = vmul.f32 %v1368, 1.442695
  %v1469 = vpow.pop %v1468
  %v1470 = vmul.f32 %v1369, 1.442695
  %v1471 = vpow.pop %v1470
  %v1472 = vmul.f32 %v1370, 1.442695
  %v1473 = vpow.pop %v1472
  %v1474 = vmul.f32 %v1371, 1.442695
  %v1475 = vpow.pop %v1474
  %v1476 = vmul.f32 %v1372, 1.442695
  %v1477 = vpow.pop %v1476
  %v1478 = vmul.f32 %v1373, 1.442695
  %v1479 = vpow.pop %v1478
  %v1480 = vmul.f32 %v1374, 1.442695
  %v1481 = vpow.pop %v1480
  %v1482 = vmul.f32 %v1375, 1.442695
  %v1483 = vpow.pop %v1482
  %v1484 = vmul.f32 %v1376, 1.442695
  %v1485 = vpow.pop %v1484
  %v1486 = vmul.f32 %v1377, 1.442695
  %v1487 = vpow.pop %v1486
  %v1488 = vmul.f32 %v1378, 1.442695
  %v1489 = vpow.pop %v1488
  %v1490 = vmul.f32 %v1379, 1.442695
  %v1491 = vpow.pop %v1490
  %v1492 = vmul.f32 %v1380, 1.442695
  %v1493 = vpow.pop %v1492
  %v1494 = vmul.f32 %v1381, 1.442695
  %v1495 = vpow.pop %v1494
  %v1496 = vmul.f32 %v1382, 1.442695
  %v1497 = vpow.pop %v1496
  %v1498 = vmul.f32 %v1383, 1.442695
  %v1499 = vpow.pop %v1498
  %v1500 = vmul.f32 %v1384, 1.442695
  %v1501 = vpow.pop %v1500
  %v1502 = vmul.f32 %v1385, 1.442695
  %v1503 = vpow.pop %v1502
  %v1504 = vmul.f32 %v1386, 1.442695
  %v1505 = vpow.pop %v1504
  %v1506 = vmul.f32 %v1387, 1.442695
  %v1507 = vpow.pop %v1506
  %v1508 = vmul.f32 %v1388, 1.442695
  %v1509 = vpow.pop %v1508
  %v1510 = vmul.f32 %v1389, 1.442695
  %v1511 = vpow.pop %v1510
  %v1512 = vmul.f32 %v1390, 1.442695
  %v1513 = vpow.pop %v1512
  %v1514 = vmul.f32 %v1391, 1.442695
  %v1515 = vpow.pop %v1514
  %v1516 = vmul.f32 %v1392, 1.442695
  %v1517 = vpow.pop %v1516
  %v1518 = vmul.f32 %v1393, 1.442695
  %v1519 = vpow.pop %v1518
  %v1520 = vmul.f32 %v1394, 1.442695
  %v1521 = vpow.pop %v1520
  %v1522 = vmul.f32 %v1395, 1.442695
  %v1523 = vpow.pop %v1522
  %v1524 = vsel %vm1268, %v1397, 0.0
  %v1525 = vsel %vm1269, %v1399, 0.0
  %v1526 = vsel %vm1270, %v1401, 0.0
  %v1527 = vsel %vm1271, %v1403, 0.0
  %v1528 = vsel %vm1272, %v1405, 0.0
  %v1529 = vsel %vm1273, %v1407, 0.0
  %v1530 = vsel %vm1274, %v1409, 0.0
  %v1531 = vsel %vm1275, %v1411, 0.0
  %v1532 = vsel %vm1276, %v1413, 0.0
  %v1533 = vsel %vm1277, %v1415, 0.0
  %v1534 = vsel %vm1278, %v1417, 0.0
  %v1535 = vsel %vm1279, %v1419, 0.0
  %v1536 = vsel %vm1280, %v1421, 0.0
  %v1537 = vsel %vm1281, %v1423, 0.0
  %v1538 = vsel %vm1282, %v1425, 0.0
  %v1539 = vsel %vm1283, %v1427, 0.0
  %v1540 = vsel %vm1284, %v1429, 0.0
  %v1541 = vsel %vm1285, %v1431, 0.0
  %v1542 = vsel %vm1286, %v1433, 0.0
  %v1543 = vsel %vm1287, %v1435, 0.0
  %v1544 = vsel %vm1288, %v1437, 0.0
  %v1545 = vsel %vm1289, %v1439, 0.0
  %v1546 = vsel %vm1290, %v1441, 0.0
  %v1547 = vsel %vm1291, %v1443, 0.0
  %v1548 = vsel %vm1292, %v1445, 0.0
  %v1549 = vsel %vm1293, %v1447, 0.0
  %v1550 = vsel %vm1294, %v1449, 0.0
  %v1551 = vsel %vm1295, %v1451, 0.0
  %v1552 = vsel %vm1296, %v1453, 0.0
  %v1553 = vsel %vm1297, %v1455, 0.0
  %v1554 = vsel %vm1298, %v1457, 0.0
  %v1555 = vsel %vm1299, %v1459, 0.0
  %v1556 = vsel %vm1300, %v1461, 0.0
  %v1557 = vsel %vm1301, %v1463, 0.0
  %v1558 = vsel %vm1302, %v1465, 0.0
  %v1559 = vsel %vm1303, %v1467, 0.0
  %v1560 = vsel %vm1304, %v1469, 0.0
  %v1561 = vsel %vm1305, %v1471, 0.0
  %v1562 = vsel %vm1306, %v1473, 0.0
  %v1563 = vsel %vm1307, %v1475, 0.0
  %v1564 = vsel %vm1308, %v1477, 0.0
  %v1565 = vsel %vm1309, %v1479, 0.0
  %v1566 = vsel %vm1310, %v1481, 0.0
  %v1567 = vsel %vm1311, %v1483, 0.0
  %v1568 = vsel %vm1312, %v1485, 0.0
  %v1569 = vsel %vm1313, %v1487, 0.0
  %v1570 = vsel %vm1314, %v1489, 0.0
  %v1571 = vsel %vm1315, %v1491, 0.0
  %v1572 = vsel %vm1316, %v1493, 0.0
  %v1573 = vsel %vm1317, %v1495, 0.0
  %v1574 = vsel %vm1318, %v1497, 0.0
  %v1575 = vsel %vm1319, %v1499, 0.0
  %v1576 = vsel %vm1320, %v1501, 0.0
  %v1577 = vsel %vm1321, %v1503, 0.0
  %v1578 = vsel %vm1322, %v1505, 0.0
  %v1579 = vsel %vm1323, %v1507, 0.0
  %v1580 = vsel %vm1324, %v1509, 0.0
  %v1581 = vsel %vm1325, %v1511, 0.0
  %v1582 = vsel %vm1326, %v1513, 0.0
  %v1583 = vsel %vm1327, %v1515, 0.0
  %v1584 = vsel %vm1328, %v1517, 0.0
  %v1585 = vsel %vm1329, %v1519, 0.0
  %v1586 = vsel %vm1330, %v1521, 0.0
  %v1587 = vsel %vm1331, %v1523, 0.0
  %v1588 = vld [vmem:[%s7] sm:$0xff]
  %v1589 = vld [vmem:[%s7 + $0x8] sm:$0xff]
  %v1590 = vadd.f32 %v1524, %v1526
  %v1591 = vadd.f32 %v1525, %v1527
  %v1592 = vadd.f32 %v1590, %v1528
  %v1593 = vadd.f32 %v1591, %v1529
  %v1594 = vadd.f32 %v1592, %v1530
  %v1595 = vadd.f32 %v1593, %v1531
  %v1596 = vadd.f32 %v1594, %v1532
  %v1597 = vadd.f32 %v1595, %v1533
  %v1598 = vadd.f32 %v1596, %v1534
  %v1599 = vadd.f32 %v1597, %v1535
  %v1600 = vadd.f32 %v1598, %v1536
  %v1601 = vadd.f32 %v1599, %v1537
  %v1602 = vadd.f32 %v1600, %v1538
  %v1603 = vadd.f32 %v1601, %v1539
  %v1604 = vadd.f32 %v1602, %v1540
  %v1605 = vadd.f32 %v1603, %v1541
  %v1606 = vadd.f32 %v1604, %v1542
  %v1607 = vadd.f32 %v1605, %v1543
  %v1608 = vadd.f32 %v1606, %v1544
  %v1609 = vadd.f32 %v1607, %v1545
  %v1610 = vadd.f32 %v1608, %v1546
  %v1611 = vadd.f32 %v1609, %v1547
  %v1612 = vadd.f32 %v1610, %v1548
  %v1613 = vadd.f32 %v1611, %v1549
  %v1614 = vadd.f32 %v1612, %v1550
  %v1615 = vadd.f32 %v1613, %v1551
  %v1616 = vadd.f32 %v1614, %v1552
  %v1617 = vadd.f32 %v1615, %v1553
  %v1618 = vadd.f32 %v1616, %v1554
  %v1619 = vadd.f32 %v1617, %v1555
  %v1620 = vadd.f32 %v1618, %v1556
  %v1621 = vadd.f32 %v1619, %v1557
  %v1622 = vadd.f32 %v1620, %v1558
  %v1623 = vadd.f32 %v1621, %v1559
  %v1624 = vadd.f32 %v1622, %v1560
  %v1625 = vadd.f32 %v1623, %v1561
  %v1626 = vadd.f32 %v1624, %v1562
  %v1627 = vadd.f32 %v1625, %v1563
  %v1628 = vadd.f32 %v1626, %v1564
  %v1629 = vadd.f32 %v1627, %v1565
  %v1630 = vadd.f32 %v1628, %v1566
  %v1631 = vadd.f32 %v1629, %v1567
  %v1632 = vadd.f32 %v1630, %v1568
  %v1633 = vadd.f32 %v1631, %v1569
  %v1634 = vadd.f32 %v1632, %v1570
  %v1635 = vadd.f32 %v1633, %v1571
  %v1636 = vadd.f32 %v1634, %v1572
  %v1637 = vadd.f32 %v1635, %v1573
  %v1638 = vadd.f32 %v1636, %v1574
  %v1639 = vadd.f32 %v1637, %v1575
  %v1640 = vadd.f32 %v1638, %v1576
  %v1641 = vadd.f32 %v1639, %v1577
  %v1642 = vadd.f32 %v1640, %v1578
  %v1643 = vadd.f32 %v1641, %v1579
  %v1644 = vadd.f32 %v1642, %v1580
  %v1645 = vadd.f32 %v1643, %v1581
  %v1646 = vadd.f32 %v1644, %v1582
  %v1647 = vadd.f32 %v1645, %v1583
  %v1648 = vadd.f32 %v1646, %v1584
  %v1649 = vadd.f32 %v1647, %v1585
  %v1650 = vadd.f32 %v1648, %v1586
  %v1651 = vadd.f32 %v1649, %v1587
  %v1652 = vadd.f32 %v1588, %v1650
  %v1653 = vadd.f32 %v1589, %v1651
  %1654 = vst [vmem:[%s7] sm:$0xff] %v1652
  %1655 = vst [vmem:[%s7 + $0x8] sm:$0xff] %v1653
  %v1656 = vld [vmem:[%s8] sm:$0xff]
  %v1657 = vld [vmem:[%s8 + $0x8] sm:$0xff]
  %v1658 = vmul.f32 %v619, %v1524
  %v1659 = vmul.f32 %v620, %v1525
  %v1660 = vmul.f32 %v621, %v1526
  %v1661 = vmul.f32 %v622, %v1527
  %v1662 = vmul.f32 %v623, %v1528
  %v1663 = vmul.f32 %v624, %v1529
  %v1664 = vmul.f32 %v625, %v1530
  %v1665 = vmul.f32 %v626, %v1531
  %v1666 = vmul.f32 %v627, %v1532
  %v1667 = vmul.f32 %v628, %v1533
  %v1668 = vmul.f32 %v629, %v1534
  %v1669 = vmul.f32 %v630, %v1535
  %v1670 = vmul.f32 %v631, %v1536
  %v1671 = vmul.f32 %v632, %v1537
  %v1672 = vmul.f32 %v633, %v1538
  %v1673 = vmul.f32 %v634, %v1539
  %v1674 = vmul.f32 %v635, %v1540
  %v1675 = vmul.f32 %v636, %v1541
  %v1676 = vmul.f32 %v637, %v1542
  %v1677 = vmul.f32 %v638, %v1543
  %v1678 = vmul.f32 %v639, %v1544
  %v1679 = vmul.f32 %v640, %v1545
  %v1680 = vmul.f32 %v641, %v1546
  %v1681 = vmul.f32 %v642, %v1547
  %v1682 = vmul.f32 %v643, %v1548
  %v1683 = vmul.f32 %v644, %v1549
  %v1684 = vmul.f32 %v645, %v1550
  %v1685 = vmul.f32 %v646, %v1551
  %v1686 = vmul.f32 %v647, %v1552
  %v1687 = vmul.f32 %v648, %v1553
  %v1688 = vmul.f32 %v649, %v1554
  %v1689 = vmul.f32 %v650, %v1555
  %v1690 = vmul.f32 %v651, %v1556
  %v1691 = vmul.f32 %v652, %v1557
  %v1692 = vmul.f32 %v653, %v1558
  %v1693 = vmul.f32 %v654, %v1559
  %v1694 = vmul.f32 %v655, %v1560
  %v1695 = vmul.f32 %v656, %v1561
  %v1696 = vmul.f32 %v657, %v1562
  %v1697 = vmul.f32 %v658, %v1563
  %v1698 = vmul.f32 %v659, %v1564
  %v1699 = vmul.f32 %v660, %v1565
  %v1700 = vmul.f32 %v661, %v1566
  %v1701 = vmul.f32 %v662, %v1567
  %v1702 = vmul.f32 %v663, %v1568
  %v1703 = vmul.f32 %v664, %v1569
  %v1704 = vmul.f32 %v665, %v1570
  %v1705 = vmul.f32 %v666, %v1571
  %v1706 = vmul.f32 %v667, %v1572
  %v1707 = vmul.f32 %v668, %v1573
  %v1708 = vmul.f32 %v669, %v1574
  %v1709 = vmul.f32 %v670, %v1575
  %v1710 = vmul.f32 %v671, %v1576
  %v1711 = vmul.f32 %v672, %v1577
  %v1712 = vmul.f32 %v673, %v1578
  %v1713 = vmul.f32 %v674, %v1579
  %v1714 = vmul.f32 %v675, %v1580
  %v1715 = vmul.f32 %v676, %v1581
  %v1716 = vmul.f32 %v677, %v1582
  %v1717 = vmul.f32 %v678, %v1583
  %v1718 = vmul.f32 %v679, %v1584
  %v1719 = vmul.f32 %v680, %v1585
  %v1720 = vmul.f32 %v681, %v1586
  %v1721 = vmul.f32 %v682, %v1587
  %v1722 = vadd.f32 %v1658, %v1660
  %v1723 = vadd.f32 %v1659, %v1661
  %v1724 = vadd.f32 %v1722, %v1662
  %v1725 = vadd.f32 %v1723, %v1663
  %v1726 = vadd.f32 %v1724, %v1664
  %v1727 = vadd.f32 %v1725, %v1665
  %v1728 = vadd.f32 %v1726, %v1666
  %v1729 = vadd.f32 %v1727, %v1667
  %v1730 = vadd.f32 %v1728, %v1668
  %v1731 = vadd.f32 %v1729, %v1669
  %v1732 = vadd.f32 %v1730, %v1670
  %v1733 = vadd.f32 %v1731, %v1671
  %v1734 = vadd.f32 %v1732, %v1672
  %v1735 = vadd.f32 %v1733, %v1673
  %v1736 = vadd.f32 %v1734, %v1674
  %v1737 = vadd.f32 %v1735, %v1675
  %v1738 = vadd.f32 %v1736, %v1676
  %v1739 = vadd.f32 %v1737, %v1677
  %v1740 = vadd.f32 %v1738, %v1678
  %v1741 = vadd.f32 %v1739, %v1679
  %v1742 = vadd.f32 %v1740, %v1680
  %v1743 = vadd.f32 %v1741, %v1681
  %v1744 = vadd.f32 %v1742, %v1682
  %v1745 = vadd.f32 %v1743, %v1683
  %v1746 = vadd.f32 %v1744, %v1684
  %v1747 = vadd.f32 %v1745, %v1685
  %v1748 = vadd.f32 %v1746, %v1686
  %v1749 = vadd.f32 %v1747, %v1687
  %v1750 = vadd.f32 %v1748, %v1688
  %v1751 = vadd.f32 %v1749, %v1689
  %v1752 = vadd.f32 %v1750, %v1690
  %v1753 = vadd.f32 %v1751, %v1691
  %v1754 = vadd.f32 %v1752, %v1692
  %v1755 = vadd.f32 %v1753, %v1693
  %v1756 = vadd.f32 %v1754, %v1694
  %v1757 = vadd.f32 %v1755, %v1695
  %v1758 = vadd.f32 %v1756, %v1696
  %v1759 = vadd.f32 %v1757, %v1697
  %v1760 = vadd.f32 %v1758, %v1698
  %v1761 = vadd.f32 %v1759, %v1699
  %v1762 = vadd.f32 %v1760, %v1700
  %v1763 = vadd.f32 %v1761, %v1701
  %v1764 = vadd.f32 %v1762, %v1702
  %v1765 = vadd.f32 %v1763, %v1703
  %v1766 = vadd.f32 %v1764, %v1704
  %v1767 = vadd.f32 %v1765, %v1705
  %v1768 = vadd.f32 %v1766, %v1706
  %v1769 = vadd.f32 %v1767, %v1707
  %v1770 = vadd.f32 %v1768, %v1708
  %v1771 = vadd.f32 %v1769, %v1709
  %v1772 = vadd.f32 %v1770, %v1710
  %v1773 = vadd.f32 %v1771, %v1711
  %v1774 = vadd.f32 %v1772, %v1712
  %v1775 = vadd.f32 %v1773, %v1713
  %v1776 = vadd.f32 %v1774, %v1714
  %v1777 = vadd.f32 %v1775, %v1715
  %v1778 = vadd.f32 %v1776, %v1716
  %v1779 = vadd.f32 %v1777, %v1717
  %v1780 = vadd.f32 %v1778, %v1718
  %v1781 = vadd.f32 %v1779, %v1719
  %v1782 = vadd.f32 %v1780, %v1720
  %v1783 = vadd.f32 %v1781, %v1721
  %v1784 = vadd.f32 %v1656, %v1782
  %v1785 = vadd.f32 %v1657, %v1783
  %1786 = vst [vmem:[%s8] sm:$0xff] %v1784
  %1787 = vst [vmem:[%s8 + $0x8] sm:$0xff] %v1785
  %s1788 = smul.u32 0, 256
  %s1789 = sadd.s32 0, 1
  %s1790 = smul.u32 %s1789, 256
  %p1791 = scmp.lt.s32.totalorder %s1788, %s1790
  %s1792 = smul.u32 0, 256
  %s1793 = sadd.s32 0, 1
  %s1794 = smul.u32 %s1793, 256
  %p1795 = scmp.lt.s32.totalorder %s1792, %s1794
  %p1796 = pnand %p1791, %p1795
  %p1797 = pneg %p1796
  // Predicated region
  $region30: #{ranked_list_loss.1} parent=0 // pred_check
    _
  $region31: #{ranked_list_loss.1} parent=0 // pred_check_branch
    %1799 = sbr.rel (%p1796) target = $region33
  $region32: #{ranked_list_loss.1} parent=0 // pred_region
    %v1800 = vlaneseq
    %v1801 = vshrl.u32 %v1800, 7
    %v1802 = vadd.s32 %v1801, 8
    %v1803 = vadd.s32 %v1801, 16
    %v1804 = vadd.s32 %v1801, 24
    %v1805 = vadd.s32 %v1801, 32
    %v1806 = vadd.s32 %v1801, 40
    %v1807 = vadd.s32 %v1801, 48
    %v1808 = vadd.s32 %v1801, 56
    %v1809 = vadd.s32 %v1801, 64
    %v1810 = vadd.s32 %v1801, 72
    %v1811 = vadd.s32 %v1801, 80
    %v1812 = vadd.s32 %v1801, 88
    %v1813 = vadd.s32 %v1801, 96
    %v1814 = vadd.s32 %v1801, 104
    %v1815 = vadd.s32 %v1801, 112
    %v1816 = vadd.s32 %v1801, 120
    %v1817 = vadd.s32 %v1801, 128
    %v1818 = vadd.s32 %v1801, 136
    %v1819 = vadd.s32 %v1801, 144
    %v1820 = vadd.s32 %v1801, 152
    %v1821 = vadd.s32 %v1801, 160
    %v1822 = vadd.s32 %v1801, 168
    %v1823 = vadd.s32 %v1801, 176
    %v1824 = vadd.s32 %v1801, 184
    %v1825 = vadd.s32 %v1801, 192
    %v1826 = vadd.s32 %v1801, 200
    %v1827 = vadd.s32 %v1801, 208
    %v1828 = vadd.s32 %v1801, 216
    %v1829 = vadd.s32 %v1801, 224
    %v1830 = vadd.s32 %v1801, 232
    %v1831 = vadd.s32 %v1801, 240
    %v1832 = vadd.s32 %v1801, 248
    %v1833 = vstv %s1788
    %v1834 = vadd.s32 %v1833, %v1801
    %v1835 = vadd.s32 %v1833, %v1802
    %v1836 = vadd.s32 %v1833, %v1803
    %v1837 = vadd.s32 %v1833, %v1804
    %v1838 = vadd.s32 %v1833, %v1805
    %v1839 = vadd.s32 %v1833, %v1806
    %v1840 = vadd.s32 %v1833, %v1807
    %v1841 = vadd.s32 %v1833, %v1808
    %v1842 = vadd.s32 %v1833, %v1809
    %v1843 = vadd.s32 %v1833, %v1810
    %v1844 = vadd.s32 %v1833, %v1811
    %v1845 = vadd.s32 %v1833, %v1812
    %v1846 = vadd.s32 %v1833, %v1813
    %v1847 = vadd.s32 %v1833, %v1814
    %v1848 = vadd.s32 %v1833, %v1815
    %v1849 = vadd.s32 %v1833, %v1816
    %v1850 = vadd.s32 %v1833, %v1817
    %v1851 = vadd.s32 %v1833, %v1818
    %v1852 = vadd.s32 %v1833, %v1819
    %v1853 = vadd.s32 %v1833, %v1820
    %v1854 = vadd.s32 %v1833, %v1821
    %v1855 = vadd.s32 %v1833, %v1822
    %v1856 = vadd.s32 %v1833, %v1823
    %v1857 = vadd.s32 %v1833, %v1824
    %v1858 = vadd.s32 %v1833, %v1825
    %v1859 = vadd.s32 %v1833, %v1826
    %v1860 = vadd.s32 %v1833, %v1827
    %v1861 = vadd.s32 %v1833, %v1828
    %v1862 = vadd.s32 %v1833, %v1829
    %v1863 = vadd.s32 %v1833, %v1830
    %v1864 = vadd.s32 %v1833, %v1831
    %v1865 = vadd.s32 %v1833, %v1832
    %v1866 = vlaneseq
    %v1867 = vand.u32 %v1866, 127
    %v1868 = vadd.s32 %v1867, 128
    %v1869 = vstv %s1792
    %v1870 = vadd.s32 %v1869, %v1867
    %v1871 = vadd.s32 %v1869, %v1868
    %v1872 = vld [vmem:[%s6] sm:$0xff]
    %v1873 = vld [vmem:[%s6 + $0x8] sm:$0xff]
    %vm1874 = vcmp.eq.s32.totalorder %v1834, %v1870
    %vm1875 = vcmp.eq.s32.totalorder %v1834, %v1871
    %vm1876 = vcmp.eq.s32.totalorder %v1835, %v1870
    %vm1877 = vcmp.eq.s32.totalorder %v1835, %v1871
    %vm1878 = vcmp.eq.s32.totalorder %v1836, %v1870
    %vm1879 = vcmp.eq.s32.totalorder %v1836, %v1871
    %vm1880 = vcmp.eq.s32.totalorder %v1837, %v1870
    %vm1881 = vcmp.eq.s32.totalorder %v1837, %v1871
    %vm1882 = vcmp.eq.s32.totalorder %v1838, %v1870
    %vm1883 = vcmp.eq.s32.totalorder %v1838, %v1871
    %vm1884 = vcmp.eq.s32.totalorder %v1839, %v1870
    %vm1885 = vcmp.eq.s32.totalorder %v1839, %v1871
    %vm1886 = vcmp.eq.s32.totalorder %v1840, %v1870
    %vm1887 = vcmp.eq.s32.totalorder %v1840, %v1871
    %vm1888 = vcmp.eq.s32.totalorder %v1841, %v1870
    %vm1889 = vcmp.eq.s32.totalorder %v1841, %v1871
    %vm1890 = vcmp.eq.s32.totalorder %v1842, %v1870
    %vm1891 = vcmp.eq.s32.totalorder %v1842, %v1871
    %vm1892 = vcmp.eq.s32.totalorder %v1843, %v1870
    %vm1893 = vcmp.eq.s32.totalorder %v1843, %v1871
    %vm1894 = vcmp.eq.s32.totalorder %v1844, %v1870
    %vm1895 = vcmp.eq.s32.totalorder %v1844, %v1871
    %vm1896 = vcmp.eq.s32.totalorder %v1845, %v1870
    %vm1897 = vcmp.eq.s32.totalorder %v1845, %v1871
    %vm1898 = vcmp.eq.s32.totalorder %v1846, %v1870
    %vm1899 = vcmp.eq.s32.totalorder %v1846, %v1871
    %vm1900 = vcmp.eq.s32.totalorder %v1847, %v1870
    %vm1901 = vcmp.eq.s32.totalorder %v1847, %v1871
    %vm1902 = vcmp.eq.s32.totalorder %v1848, %v1870
    %vm1903 = vcmp.eq.s32.totalorder %v1848, %v1871
    %vm1904 = vcmp.eq.s32.totalorder %v1849, %v1870
    %vm1905 = vcmp.eq.s32.totalorder %v1849, %v1871
    %vm1906 = vcmp.eq.s32.totalorder %v1850, %v1870
    %vm1907 = vcmp.eq.s32.totalorder %v1850, %v1871
    %vm1908 = vcmp.eq.s32.totalorder %v1851, %v1870
    %vm1909 = vcmp.eq.s32.totalorder %v1851, %v1871
    %vm1910 = vcmp.eq.s32.totalorder %v1852, %v1870
    %vm1911 = vcmp.eq.s32.totalorder %v1852, %v1871
    %vm1912 = vcmp.eq.s32.totalorder %v1853, %v1870
    %vm1913 = vcmp.eq.s32.totalorder %v1853, %v1871
    %vm1914 = vcmp.eq.s32.totalorder %v1854, %v1870
    %vm1915 = vcmp.eq.s32.totalorder %v1854, %v1871
    %vm1916 = vcmp.eq.s32.totalorder %v1855, %v1870
    %vm1917 = vcmp.eq.s32.totalorder %v1855, %v1871
    %vm1918 = vcmp.eq.s32.totalorder %v1856, %v1870
    %vm1919 = vcmp.eq.s32.totalorder %v1856, %v1871
    %vm1920 = vcmp.eq.s32.totalorder %v1857, %v1870
    %vm1921 = vcmp.eq.s32.totalorder %v1857, %v1871
    %vm1922 = vcmp.eq.s32.totalorder %v1858, %v1870
    %vm1923 = vcmp.eq.s32.totalorder %v1858, %v1871
    %vm1924 = vcmp.eq.s32.totalorder %v1859, %v1870
    %vm1925 = vcmp.eq.s32.totalorder %v1859, %v1871
    %vm1926 = vcmp.eq.s32.totalorder %v1860, %v1870
    %vm1927 = vcmp.eq.s32.totalorder %v1860, %v1871
    %vm1928 = vcmp.eq.s32.totalorder %v1861, %v1870
    %vm1929 = vcmp.eq.s32.totalorder %v1861, %v1871
    %vm1930 = vcmp.eq.s32.totalorder %v1862, %v1870
    %vm1931 = vcmp.eq.s32.totalorder %v1862, %v1871
    %vm1932 = vcmp.eq.s32.totalorder %v1863, %v1870
    %vm1933 = vcmp.eq.s32.totalorder %v1863, %v1871
    %vm1934 = vcmp.eq.s32.totalorder %v1864, %v1870
    %vm1935 = vcmp.eq.s32.totalorder %v1864, %v1871
    %vm1936 = vcmp.eq.s32.totalorder %v1865, %v1870
    %vm1937 = vcmp.eq.s32.totalorder %v1865, %v1871
    %v1938 = vsel %vm1874, 0.0, %v1076
    %v1939 = vsel %vm1875, 0.0, %v1077
    %v1940 = vsel %vm1876, 0.0, %v1078
    %v1941 = vsel %vm1877, 0.0, %v1079
    %v1942 = vsel %vm1878, 0.0, %v1080
    %v1943 = vsel %vm1879, 0.0, %v1081
    %v1944 = vsel %vm1880, 0.0, %v1082
    %v1945 = vsel %vm1881, 0.0, %v1083
    %v1946 = vsel %vm1882, 0.0, %v1084
    %v1947 = vsel %vm1883, 0.0, %v1085
    %v1948 = vsel %vm1884, 0.0, %v1086
    %v1949 = vsel %vm1885, 0.0, %v1087
    %v1950 = vsel %vm1886, 0.0, %v1088
    %v1951 = vsel %vm1887, 0.0, %v1089
    %v1952 = vsel %vm1888, 0.0, %v1090
    %v1953 = vsel %vm1889, 0.0, %v1091
    %v1954 = vsel %vm1890, 0.0, %v1092
    %v1955 = vsel %vm1891, 0.0, %v1093
    %v1956 = vsel %vm1892, 0.0, %v1094
    %v1957 = vsel %vm1893, 0.0, %v1095
    %v1958 = vsel %vm1894, 0.0, %v1096
    %v1959 = vsel %vm1895, 0.0, %v1097
    %v1960 = vsel %vm1896, 0.0, %v1098
    %v1961 = vsel %vm1897, 0.0, %v1099
    %v1962 = vsel %vm1898, 0.0, %v1100
    %v1963 = vsel %vm1899, 0.0, %v1101
    %v1964 = vsel %vm1900, 0.0, %v1102
    %v1965 = vsel %vm1901, 0.0, %v1103
    %v1966 = vsel %vm1902, 0.0, %v1104
    %v1967 = vsel %vm1903, 0.0, %v1105
    %v1968 = vsel %vm1904, 0.0, %v1106
    %v1969 = vsel %vm1905, 0.0, %v1107
    %v1970 = vsel %vm1906, 0.0, %v1108
    %v1971 = vsel %vm1907, 0.0, %v1109
    %v1972 = vsel %vm1908, 0.0, %v1110
    %v1973 = vsel %vm1909, 0.0, %v1111
    %v1974 = vsel %vm1910, 0.0, %v1112
    %v1975 = vsel %vm1911, 0.0, %v1113
    %v1976 = vsel %vm1912, 0.0, %v1114
    %v1977 = vsel %vm1913, 0.0, %v1115
    %v1978 = vsel %vm1914, 0.0, %v1116
    %v1979 = vsel %vm1915, 0.0, %v1117
    %v1980 = vsel %vm1916, 0.0, %v1118
    %v1981 = vsel %vm1917, 0.0, %v1119
    %v1982 = vsel %vm1918, 0.0, %v1120
    %v1983 = vsel %vm1919, 0.0, %v1121
    %v1984 = vsel %vm1920, 0.0, %v1122
    %v1985 = vsel %vm1921, 0.0, %v1123
    %v1986 = vsel %vm1922, 0.0, %v1124
    %v1987 = vsel %vm1923, 0.0, %v1125
    %v1988 = vsel %vm1924, 0.0, %v1126
    %v1989 = vsel %vm1925, 0.0, %v1127
    %v1990 = vsel %vm1926, 0.0, %v1128
    %v1991 = vsel %vm1927, 0.0, %v1129
    %v1992 = vsel %vm1928, 0.0, %v1130
    %v1993 = vsel %vm1929, 0.0, %v1131
    %v1994 = vsel %vm1930, 0.0, %v1132
    %v1995 = vsel %vm1931, 0.0, %v1133
    %v1996 = vsel %vm1932, 0.0, %v1134
    %v1997 = vsel %vm1933, 0.0, %v1135
    %v1998 = vsel %vm1934, 0.0, %v1136
    %v1999 = vsel %vm1935, 0.0, %v1137
    %v2000 = vsel %vm1936, 0.0, %v1138
    %v2001 = vsel %vm1937, 0.0, %v1139
    %v2002 = vadd.f32 %v1938, %v1940
    %v2003 = vadd.f32 %v1939, %v1941
    %v2004 = vadd.f32 %v2002, %v1942
    %v2005 = vadd.f32 %v2003, %v1943
    %v2006 = vadd.f32 %v2004, %v1944
    %v2007 = vadd.f32 %v2005, %v1945
    %v2008 = vadd.f32 %v2006, %v1946
    %v2009 = vadd.f32 %v2007, %v1947
    %v2010 = vadd.f32 %v2008, %v1948
    %v2011 = vadd.f32 %v2009, %v1949
    %v2012 = vadd.f32 %v2010, %v1950
    %v2013 = vadd.f32 %v2011, %v1951
    %v2014 = vadd.f32 %v2012, %v1952
    %v2015 = vadd.f32 %v2013, %v1953
    %v2016 = vadd.f32 %v2014, %v1954
    %v2017 = vadd.f32 %v2015, %v1955
    %v2018 = vadd.f32 %v2016, %v1956
    %v2019 = vadd.f32 %v2017, %v1957
    %v2020 = vadd.f32 %v2018, %v1958
    %v2021 = vadd.f32 %v2019, %v1959
    %v2022 = vadd.f32 %v2020, %v1960
    %v2023 = vadd.f32 %v2021, %v1961
    %v2024 = vadd.f32 %v2022, %v1962
    %v2025 = vadd.f32 %v2023, %v1963
    %v2026 = vadd.f32 %v2024, %v1964
    %v2027 = vadd.f32 %v2025, %v1965
    %v2028 = vadd.f32 %v2026, %v1966
    %v2029 = vadd.f32 %v2027, %v1967
    %v2030 = vadd.f32 %v2028, %v1968
    %v2031 = vadd.f32 %v2029, %v1969
    %v2032 = vadd.f32 %v2030, %v1970
    %v2033 = vadd.f32 %v2031, %v1971
    %v2034 = vadd.f32 %v2032, %v1972
    %v2035 = vadd.f32 %v2033, %v1973
    %v2036 = vadd.f32 %v2034, %v1974
    %v2037 = vadd.f32 %v2035, %v1975
    %v2038 = vadd.f32 %v2036, %v1976
    %v2039 = vadd.f32 %v2037, %v1977
    %v2040 = vadd.f32 %v2038, %v1978
    %v2041 = vadd.f32 %v2039, %v1979
    %v2042 = vadd.f32 %v2040, %v1980
    %v2043 = vadd.f32 %v2041, %v1981
    %v2044 = vadd.f32 %v2042, %v1982
    %v2045 = vadd.f32 %v2043, %v1983
    %v2046 = vadd.f32 %v2044, %v1984
    %v2047 = vadd.f32 %v2045, %v1985
    %v2048 = vadd.f32 %v2046, %v1986
    %v2049 = vadd.f32 %v2047, %v1987
    %v2050 = vadd.f32 %v2048, %v1988
    %v2051 = vadd.f32 %v2049, %v1989
    %v2052 = vadd.f32 %v2050, %v1990
    %v2053 = vadd.f32 %v2051, %v1991
    %v2054 = vadd.f32 %v2052, %v1992
    %v2055 = vadd.f32 %v2053, %v1993
    %v2056 = vadd.f32 %v2054, %v1994
    %v2057 = vadd.f32 %v2055, %v1995
    %v2058 = vadd.f32 %v2056, %v1996
    %v2059 = vadd.f32 %v2057, %v1997
    %v2060 = vadd.f32 %v2058, %v1998
    %v2061 = vadd.f32 %v2059, %v1999
    %v2062 = vadd.f32 %v2060, %v2000
    %v2063 = vadd.f32 %v2061, %v2001
    %v2064 = vadd.f32 %v1872, %v2062
    %v2065 = vadd.f32 %v1873, %v2063
    %2066 = vst [vmem:[%s6] sm:$0xff] %v2064
    %2067 = vst [vmem:[%s6 + $0x8] sm:$0xff] %v2065
  $region33: #{ranked_list_loss.1} parent=0 // pred_fallthru
    _
  %p2068 = pneg %p1797
  // Predicated region
  $region34: #{ranked_list_loss.1} parent=0 // pred_check
    _
  $region35: #{ranked_list_loss.1} parent=0 // pred_check_branch
    %2070 = sbr.rel (%p1797) target = $region37
  $region36: #{ranked_list_loss.1} parent=0 // pred_region
    %v2071 = vld [vmem:[%s6] sm:$0xff]
    %v2072 = vld [vmem:[%s6 + $0x8] sm:$0xff]
    %v2073 = vadd.f32 %v1076, %v1078
    %v2074 = vadd.f32 %v1077, %v1079
    %v2075 = vadd.f32 %v2073, %v1080
    %v2076 = vadd.f32 %v2074, %v1081
    %v2077 = vadd.f32 %v2075, %v1082
    %v2078 = vadd.f32 %v2076, %v1083
    %v2079 = vadd.f32 %v2077, %v1084
    %v2080 = vadd.f32 %v2078, %v1085
    %v2081 = vadd.f32 %v2079, %v1086
    %v2082 = vadd.f32 %v2080, %v1087
    %v2083 = vadd.f32 %v2081, %v1088
    %v2084 = vadd.f32 %v2082, %v1089
    %v2085 = vadd.f32 %v2083, %v1090
    %v2086 = vadd.f32 %v2084, %v1091
    %v2087 = vadd.f32 %v2085, %v1092
    %v2088 = vadd.f32 %v2086, %v1093
    %v2089 = vadd.f32 %v2087, %v1094
    %v2090 = vadd.f32 %v2088, %v1095
    %v2091 = vadd.f32 %v2089, %v1096
    %v2092 = vadd.f32 %v2090, %v1097
    %v2093 = vadd.f32 %v2091, %v1098
    %v2094 = vadd.f32 %v2092, %v1099
    %v2095 = vadd.f32 %v2093, %v1100
    %v2096 = vadd.f32 %v2094, %v1101
    %v2097 = vadd.f32 %v2095, %v1102
    %v2098 = vadd.f32 %v2096, %v1103
    %v2099 = vadd.f32 %v2097, %v1104
    %v2100 = vadd.f32 %v2098, %v1105
    %v2101 = vadd.f32 %v2099, %v1106
    %v2102 = vadd.f32 %v2100, %v1107
    %v2103 = vadd.f32 %v2101, %v1108
    %v2104 = vadd.f32 %v2102, %v1109
    %v2105 = vadd.f32 %v2103, %v1110
    %v2106 = vadd.f32 %v2104, %v1111
    %v2107 = vadd.f32 %v2105, %v1112
    %v2108 = vadd.f32 %v2106, %v1113
    %v2109 = vadd.f32 %v2107, %v1114
    %v2110 = vadd.f32 %v2108, %v1115
    %v2111 = vadd.f32 %v2109, %v1116
    %v2112 = vadd.f32 %v2110, %v1117
    %v2113 = vadd.f32 %v2111, %v1118
    %v2114 = vadd.f32 %v2112, %v1119
    %v2115 = vadd.f32 %v2113, %v1120
    %v2116 = vadd.f32 %v2114, %v1121
    %v2117 = vadd.f32 %v2115, %v1122
    %v2118 = vadd.f32 %v2116, %v1123
    %v2119 = vadd.f32 %v2117, %v1124
    %v2120 = vadd.f32 %v2118, %v1125
    %v2121 = vadd.f32 %v2119, %v1126
    %v2122 = vadd.f32 %v2120, %v1127
    %v2123 = vadd.f32 %v2121, %v1128
    %v2124 = vadd.f32 %v2122, %v1129
    %v2125 = vadd.f32 %v2123, %v1130
    %v2126 = vadd.f32 %v2124, %v1131
    %v2127 = vadd.f32 %v2125, %v1132
    %v2128 = vadd.f32 %v2126, %v1133
    %v2129 = vadd.f32 %v2127, %v1134
    %v2130 = vadd.f32 %v2128, %v1135
    %v2131 = vadd.f32 %v2129, %v1136
    %v2132 = vadd.f32 %v2130, %v1137
    %v2133 = vadd.f32 %v2131, %v1138
    %v2134 = vadd.f32 %v2132, %v1139
    %v2135 = vadd.f32 %v2071, %v2133
    %v2136 = vadd.f32 %v2072, %v2134
    %2137 = vst [vmem:[%s6] sm:$0xff] %v2135
    %2138 = vst [vmem:[%s6 + $0x8] sm:$0xff] %v2136
  $region37: #{ranked_list_loss.1} parent=0 // pred_fallthru
    _
  // Predicated region
  $region38: #{ranked_list_loss.1} parent=0 // pred_check
    _
  $region39: #{ranked_list_loss.1} parent=0 // pred_check_branch
    %2140 = sbr.rel (0) target = $region41
  $region40: #{ranked_list_loss.1} parent=0 // pred_region
    _
  $region41: #{ranked_list_loss.1} parent=0 // pred_fallthru
    _
  // Predicated region
  $region42: #{ranked_list_loss.1} parent=0 // pred_check
    _
  $region43: #{ranked_list_loss.1} parent=0 // pred_check_branch
    %2142 = sbr.rel (0) target = $region45
  $region44: #{ranked_list_loss.1} parent=0 // pred_region
    _
  $region45: #{ranked_list_loss.1} parent=0 // pred_fallthru
    _
  // Predicated region
  $region46: #{ranked_list_loss.1} parent=0 // pred_check
    _
  $region47: #{ranked_list_loss.1} parent=0 // pred_check_branch
    %2144 = sbr.rel (0) target = $region49
  $region48: #{ranked_list_loss.1} parent=0 // pred_region
    _
  $region49: #{ranked_list_loss.1} parent=0 // pred_fallthru
    _
  // Predicated region
  $region50: #{ranked_list_loss.1} parent=0 // pred_check
    _
  $region51: #{ranked_list_loss.1} parent=0 // pred_check_branch
    %2146 = sbr.rel (0) target = $region53
  $region52: #{ranked_list_loss.1} parent=0 // pred_region
    _
  $region53: #{ranked_list_loss.1} parent=0 // pred_fallthru
    _
  // Predicated region
  $region54: #{ranked_list_loss.1} parent=0 // pred_check
    _
  $region55: #{ranked_list_loss.1} parent=0 // pred_check_branch
    %2148 = sbr.rel (0) target = $region57
  $region56: #{ranked_list_loss.1} parent=0 // pred_region
    _
  $region57: #{ranked_list_loss.1} parent=0 // pred_fallthru
    _
  // Predicated region
  $region58: #{ranked_list_loss.1} parent=0 // pred_check
    _
  $region59: #{ranked_list_loss.1} parent=0 // pred_check_branch
    %2150 = sbr.rel (0) target = $region61
  $region60: #{ranked_list_loss.1} parent=0 // pred_region
    _
  $region61: #{ranked_list_loss.1} parent=0 // pred_fallthru
    _

</llo_original>
